<compile_context>
chip_gen: v6e
topology: v6e:2x2x1
jax: 0.10.0
libtpu: 0.0.40
codegen_flags: <defaults>
</compile_context>

<pallas_src>
import math

import jax
import jax.numpy as jnp
from jax.experimental import pallas as pl
from jax.experimental.pallas import tpu as pltpu

_GELU_C = 0.7978845608028654  # sqrt(2 / pi)


# ----------------------------------------------------------------------------
# Fused FFN kernel:  o = (gelu(x @ w1 + b1)) @ w2 + b2
# ----------------------------------------------------------------------------
def _ffn_kernel(x_ref, w1_ref, b1_ref, w2_ref, b2_ref, o_ref):
    hp = jax.lax.Precision.HIGHEST

    x = x_ref[...]
    h = jnp.dot(x, w1_ref[...], preferred_element_type=jnp.float32,
                precision=hp)
    h = h + b1_ref[...]                                    # f32 bias add

    # tanh-approx GELU (tanh goes to the EUP slot)
    h = 0.5 * h * (1.0 + jnp.tanh(_GELU_C * (h + 0.044715 * h * h * h)))

    y = jnp.dot(h.astype(w2_ref.dtype), w2_ref[...],
                preferred_element_type=jnp.float32, precision=hp)
    y = y + b2_ref[...]
    o_ref[...] = y.astype(o_ref.dtype)


def _round_up(n, m):
    return (n + m - 1) // m * m


# ----------------------------------------------------------------------------
# Wrapper: padding + BlockSpecs + pallas_call
# ----------------------------------------------------------------------------
def feed_forward(x, params, *, tm=512, compute_dtype=jnp.float32):
    """x: (..., dim).  params: w1 (dim, hidden), b1 (hidden,),
    w2 (hidden, dim), b2 (dim,).  Returns same shape/dtype as x."""
    orig_shape = x.shape
    dim = orig_shape[-1]
    hidden = params["w1"].shape[-1]
    M = math.prod(orig_shape[:-1])

    # Lane-dense feature padding (multiples of 128) and row-tile padding.
    dim_p = _round_up(dim, 128)
    hid_p = _round_up(hidden, 128)
    tm_eff = min(tm, _round_up(M, 8))
    M_p = _round_up(M, tm_eff)

    cd = compute_dtype
    x2 = x.reshape(M, dim)
    xp = jnp.zeros((M_p, dim_p), cd).at[:M, :dim].set(x2.astype(cd))
    w1 = jnp.zeros((dim_p, hid_p), cd).at[:dim, :hidden].set(
        params["w1"].astype(cd))
    b1 = jnp.zeros((1, hid_p), jnp.float32).at[0, :hidden].set(
        params["b1"].astype(jnp.float32))
    w2 = jnp.zeros((hid_p, dim_p), cd).at[:hidden, :dim].set(
        params["w2"].astype(cd))
    b2 = jnp.zeros((1, dim_p), jnp.float32).at[0, :dim].set(
        params["b2"].astype(jnp.float32))

    grid = (M_p // tm_eff,)
    out = pl.pallas_call(
        _ffn_kernel,
        out_shape=jax.ShapeDtypeStruct((M_p, dim_p), jnp.float32),
        grid_spec=pltpu.PrefetchScalarGridSpec(
            num_scalar_prefetch=0,
            grid=grid,
            in_specs=[
                # activations: tiled over rows
                pl.BlockSpec((tm_eff, dim_p), lambda i: (i, 0)),
                # weights / biases: constant block index -> VMEM resident,
                # DMA'd once for the whole grid
                pl.BlockSpec((dim_p, hid_p), lambda i: (0, 0)),
                pl.BlockSpec((1, hid_p), lambda i: (0, 0)),
                pl.BlockSpec((hid_p, dim_p), lambda i: (0, 0)),
                pl.BlockSpec((1, dim_p), lambda i: (0, 0)),
            ],
            out_specs=pl.BlockSpec((tm_eff, dim_p), lambda i: (i, 0)),
        ),
        compiler_params=pltpu.CompilerParams(
            dimension_semantics=("parallel",)),
    )(xp, w1, b1, w2, b2)

    return out[:M, :dim].reshape(orig_shape).astype(x.dtype)


# ----------------------------------------------------------------------------
# Pure-JAX reference (same GELU form, full-precision matmuls)
# ----------------------------------------------------------------------------
def reference_forward(x, params):
    hp = jax.lax.Precision.HIGHEST
    h = jnp.dot(x, params["w1"], precision=hp) + params["b1"]
    h = 0.5 * h * (1.0 + jnp.tanh(_GELU_C * (h + 0.044715 * h * h * h)))
    return jnp.dot(h, params["w2"], precision=hp) + params["b2"]


if __name__ == "__main__":
    # Small shapes consistent with the module: batch=2, seq=8, dim=32, hidden=64.
    B, S, dim, hidden = 2, 8, 32, 64

    key = jax.random.PRNGKey(0)
    kx, k1, k2, k3, k4 = jax.random.split(key, 5)
    x = jax.random.normal(kx, (B, S, dim), jnp.float32)
    params = {
        "w1": 0.1 * jax.random.normal(k1, (dim, hidden), jnp.float32),
        "b1": 0.1 * jax.random.normal(k2, (hidden,), jnp.float32),
        "w2": 0.1 * jax.random.normal(k3, (hidden, dim), jnp.float32),
        "b2": 0.1 * jax.random.normal(k4, (dim,), jnp.float32),
    }

    out = jax.block_until_ready(feed_forward(x, params))
    ref = jax.block_until_ready(reference_forward(x, params))

    assert out.shape == ref.shape, (out.shape, ref.shape)
    max_err = float(jnp.max(jnp.abs(out - ref)))
    assert jnp.allclose(out, ref, atol=1e-4, rtol=1e-4), max_err

    print("KERNEL_OK")
</pallas_src>

<mosaic_0001>
module attributes {stable_mosaic.version = 11 : i64} {
  func.func @_ffn_kernel(%arg0: i32, %arg1: memref<16x128xf32, #tpu.memory_space<vmem>>, %arg2: memref<128x128xf32, #tpu.memory_space<vmem>>, %arg3: memref<1x128xf32, #tpu.memory_space<vmem>>, %arg4: memref<128x128xf32, #tpu.memory_space<vmem>>, %arg5: memref<1x128xf32, #tpu.memory_space<vmem>>, %arg6: memref<16x128xf32, #tpu.memory_space<vmem>>) attributes {dimension_semantics = [#tpu.dimension_semantics<parallel>], iteration_bounds = array<i64: 1>, scalar_prefetch = 0 : i64, scratch_operands = 0 : i64, tpu.core_type = #tpu.core_type<tc>, window_params = [{transform_indices = @transform_0, window_bounds = array<i64: 16, 128>}, {pipeline_mode = #tpu.pipeline_mode<synchronous>, transform_indices = @transform_1, window_bounds = array<i64: 128, 128>}, {pipeline_mode = #tpu.pipeline_mode<synchronous>, transform_indices = @transform_2, window_bounds = array<i64: 1, 128>}, {pipeline_mode = #tpu.pipeline_mode<synchronous>, transform_indices = @transform_3, window_bounds = array<i64: 128, 128>}, {pipeline_mode = #tpu.pipeline_mode<synchronous>, transform_indices = @transform_4, window_bounds = array<i64: 1, 128>}, {transform_indices = @transform_5, window_bounds = array<i64: 16, 128>}]} {
    %c0 = arith.constant 0 : index
    %c0_0 = arith.constant 0 : index
    %0 = vector.load %arg1[%c0, %c0_0] : memref<16x128xf32, #tpu.memory_space<vmem>>, vector<16x128xf32>
    %c0_1 = arith.constant 0 : index
    %c0_2 = arith.constant 0 : index
    %1 = vector.load %arg2[%c0_1, %c0_2] : memref<128x128xf32, #tpu.memory_space<vmem>>, vector<128x128xf32>
    %cst = arith.constant dense<0.000000e+00> : vector<16x128xf32>
    %2 = tpu.matmul %0, %1, %cst {dimension_numbers = #tpu.dot_dimension_numbers<[1], [0], [0], [1], [0, 0, 1, 1], [], []>, precision = #tpu.contract_precision<fp32>} : vector<16x128xf32>, vector<128x128xf32>, vector<16x128xf32> -> vector<16x128xf32>
    %c0_3 = arith.constant 0 : index
    %c0_4 = arith.constant 0 : index
    %3 = vector.load %arg3[%c0_3, %c0_4] : memref<1x128xf32, #tpu.memory_space<vmem>>, vector<1x128xf32>
    %4 = vector.broadcast %3 : vector<1x128xf32> to vector<16x128xf32>
    %5 = arith.addf %2, %4 : vector<16x128xf32>
    %cst_5 = arith.constant 5.000000e-01 : f32
    %6 = vector.broadcast %cst_5 : f32 to vector<16x128xf32>
    %7 = arith.mulf %6, %5 : vector<16x128xf32>
    %cst_6 = arith.constant 4.471500e-02 : f32
    %8 = vector.broadcast %cst_6 : f32 to vector<16x128xf32>
    %9 = arith.mulf %8, %5 : vector<16x128xf32>
    %10 = arith.mulf %9, %5 : vector<16x128xf32>
    %11 = arith.mulf %10, %5 : vector<16x128xf32>
    %12 = arith.addf %5, %11 : vector<16x128xf32>
    %cst_7 = arith.constant 0.797884583 : f32
    %13 = vector.broadcast %cst_7 : f32 to vector<16x128xf32>
    %14 = arith.mulf %13, %12 : vector<16x128xf32>
    %15 = math.tanh %14 : vector<16x128xf32>
    %cst_8 = arith.constant 1.000000e+00 : f32
    %16 = vector.broadcast %cst_8 : f32 to vector<16x128xf32>
    %17 = arith.addf %16, %15 : vector<16x128xf32>
    %18 = arith.mulf %7, %17 : vector<16x128xf32>
    %c0_9 = arith.constant 0 : index
    %c0_10 = arith.constant 0 : index
    %19 = vector.load %arg4[%c0_9, %c0_10] : memref<128x128xf32, #tpu.memory_space<vmem>>, vector<128x128xf32>
    %cst_11 = arith.constant dense<0.000000e+00> : vector<16x128xf32>
    %20 = tpu.matmul %18, %19, %cst_11 {dimension_numbers = #tpu.dot_dimension_numbers<[1], [0], [0], [1], [0, 0, 1, 1], [], []>, precision = #tpu.contract_precision<fp32>} : vector<16x128xf32>, vector<128x128xf32>, vector<16x128xf32> -> vector<16x128xf32>
    %c0_12 = arith.constant 0 : index
    %c0_13 = arith.constant 0 : index
    %21 = vector.load %arg5[%c0_12, %c0_13] : memref<1x128xf32, #tpu.memory_space<vmem>>, vector<1x128xf32>
    %22 = vector.broadcast %21 : vector<1x128xf32> to vector<16x128xf32>
    %23 = arith.addf %20, %22 : vector<16x128xf32>
    %c0_14 = arith.constant 0 : index
    %c0_15 = arith.constant 0 : index
    %24 = vector.load %arg6[%c0_14, %c0_15] : memref<16x128xf32, #tpu.memory_space<vmem>>, vector<16x128xf32>
    tpu.vector_store %arg6[%c0_14, %c0_15], %23 {strides = array<i32>} : memref<16x128xf32, #tpu.memory_space<vmem>>, vector<16x128xf32>,
    return
  }
  func.func @transform_0(%arg0: i32) -> (i32, i32) {
    %c0_i32 = arith.constant 0 : i32
    %c0_i32_0 = arith.constant 0 : i32
    return %arg0, %c0_i32 : i32, i32
  }
  func.func @transform_1(%arg0: i32) -> (i32, i32) {
    %c0_i32 = arith.constant 0 : i32
    %c0_i32_0 = arith.constant 0 : i32
    %c0_i32_1 = arith.constant 0 : i32
    return %c0_i32, %c0_i32_0 : i32, i32
  }
  func.func @transform_2(%arg0: i32) -> (i32, i32) {
    %c0_i32 = arith.constant 0 : i32
    %c0_i32_0 = arith.constant 0 : i32
    %c0_i32_1 = arith.constant 0 : i32
    return %c0_i32, %c0_i32_0 : i32, i32
  }
  func.func @transform_3(%arg0: i32) -> (i32, i32) {
    %c0_i32 = arith.constant 0 : i32
    %c0_i32_0 = arith.constant 0 : i32
    %c0_i32_1 = arith.constant 0 : i32
    return %c0_i32, %c0_i32_0 : i32, i32
  }
  func.func @transform_4(%arg0: i32) -> (i32, i32) {
    %c0_i32 = arith.constant 0 : i32
    %c0_i32_0 = arith.constant 0 : i32
    %c0_i32_1 = arith.constant 0 : i32
    return %c0_i32, %c0_i32_0 : i32, i32
  }
  func.func @transform_5(%arg0: i32) -> (i32, i32) {
    %c0_i32 = arith.constant 0 : i32
    %c0_i32_0 = arith.constant 0 : i32
    return %arg0, %c0_i32 : i32, i32
  }
}

</mosaic_0001>

<llo_original>
// kernel: tpu_custom_call.1
$region0: #{tpu_custom_call.1}
  #allocation0 [shape = 'u32[]', space=smem, size = 0x4, offset = 0x4, fixed_abs, tag = 'smem constant byte address 0x4 - core index']
  #allocation1 [shape = 'u32[144,128]{1,0:T(1,128)}', space=vmem, size = 0x12000, scoped, tag = 'internal scratch']
  %s0 = inlined_call_operand.hbm [shape: f32[16,128], index: 0, kind: input, shape index: {}]
  %s1 = inlined_call_operand.hbm [shape: f32[128,128], index: 1, kind: input, shape index: {}]
  %s2 = inlined_call_operand.vmem [shape: f32[1,128], index: 2, kind: input, shape index: {}]
  %s3 = inlined_call_operand.hbm [shape: f32[128,128], index: 3, kind: input, shape index: {}]
  %s4 = inlined_call_operand.vmem [shape: f32[1,128], index: 4, kind: input, shape index: {}]
  %s5 = inlined_call_operand.hbm [shape: f32[16,128], index: 5, kind: output, shape index: {}]
  %s6 = sld [smem:[#allocation0]]
  $region42: #{tpu_custom_call.1} parent=0
    _
  %s8 = ssub.s32 1, %s6
  %s9 = scalar_select 0, %s8, %s6
  $region1: #{tpu_custom_call.1} parent=0
    #allocation2 [shape = 'u8[8192]{0}', space=vmem, size = 0x2000, scoped, tag = 'input window, operand 0, single buffered']
    #allocation3 [shape = 's32[1]{0}', space=sflag, size = 0x4, scoped, tag = 'scoped memory for tpu_custom_call.1']
    #allocation4 [shape = 's32[1]{0}', space=sflag, size = 0x4, scoped, tag = 'scoped memory for tpu_custom_call.1']
    #allocation5 [shape = 'u8[65536]{0}', space=vmem, size = 0x10000, scoped, tag = 'input window, operand 1, single buffered']
    #allocation6 [shape = 's32[1]{0}', space=sflag, size = 0x4, scoped, tag = 'scoped memory for tpu_custom_call.1']
    #allocation7 [shape = 'u8[65536]{0}', space=vmem, size = 0x10000, scoped, tag = 'input window, operand 3, single buffered']
    #allocation8 [shape = 'u8[8192]{0}', space=vmem, size = 0x2000, scoped, tag = 'output window, operand 0, single buffered']
    %10 = vsyncpa [#allocation3], 0
    %11 = vsyncpa [#allocation6], 0
    %12 = vsyncpa [#allocation4], 0
    // Predicated region
    $region2: #{tpu_custom_call.1} parent=1 // pred_check
      _
    $region3: #{tpu_custom_call.1} parent=1 // pred_check_branch
      %14 = sbr.rel (0) target = $region5
    $region4: #{tpu_custom_call.1} parent=1 // pred_region
      %s16 = ssub.s32 256, 256
      %17 = vsyncadd [#allocation3], %s16
      %s18 = sshll.u32 [#allocation2], 4
      %s19 = int_to_ptr.vmem [resolvable:$true] %s18
      %24 = dma.hbm_to_vmem [thread:$0]  %s0, 256, %s19, [#allocation3], 128, 128, 8
    $region5: #{tpu_custom_call.1} parent=1 // pred_fallthru
      _
    // Predicated region
    $region6: #{tpu_custom_call.1} parent=1 // pred_check
      _
    $region7: #{tpu_custom_call.1} parent=1 // pred_check_branch
      %26 = sbr.rel (0) target = $region9
    $region8: #{tpu_custom_call.1} parent=1 // pred_region
      %s28 = ssub.s32 2048, 2048
      %29 = vsyncadd [#allocation6], %s28
      %s30 = sshll.u32 [#allocation5], 4
      %s31 = int_to_ptr.vmem [resolvable:$true] %s30
      %36 = dma.hbm_to_vmem [thread:$0]  %s1, 2048, %s31, [#allocation6], 128, 128, 8
    $region9: #{tpu_custom_call.1} parent=1 // pred_fallthru
      _
    // Predicated region
    $region10: #{tpu_custom_call.1} parent=1 // pred_check
      _
    $region11: #{tpu_custom_call.1} parent=1 // pred_check_branch
      %38 = sbr.rel (0) target = $region13
    $region12: #{tpu_custom_call.1} parent=1 // pred_region
      _
    $region13: #{tpu_custom_call.1} parent=1 // pred_fallthru
      _
    // Predicated region
    $region14: #{tpu_custom_call.1} parent=1 // pred_check
      _
    $region15: #{tpu_custom_call.1} parent=1 // pred_check_branch
      %40 = sbr.rel (0) target = $region17
    $region16: #{tpu_custom_call.1} parent=1 // pred_region
      %s42 = ssub.s32 2048, 2048
      %43 = vsyncadd [#allocation6], %s42
      %s44 = sshll.u32 [#allocation7], 4
      %s45 = int_to_ptr.vmem [resolvable:$true] %s44
      %50 = dma.hbm_to_vmem [thread:$0]  %s3, 2048, %s45, [#allocation6], 128, 128, 8
    $region17: #{tpu_custom_call.1} parent=1 // pred_fallthru
      _
    // Predicated region
    $region18: #{tpu_custom_call.1} parent=1 // pred_check
      _
    $region19: #{tpu_custom_call.1} parent=1 // pred_check_branch
      %52 = sbr.rel (0) target = $region21
    $region20: #{tpu_custom_call.1} parent=1 // pred_region
      _
    $region21: #{tpu_custom_call.1} parent=1 // pred_fallthru
      _
    // Predicated region
    $region22: #{tpu_custom_call.1} parent=1 // pred_check
      _
    $region23: #{tpu_custom_call.1} parent=1 // pred_check_branch
      %54 = sbr.rel (0) target = $region25
    $region24: #{tpu_custom_call.1} parent=1 // pred_region
      %55 = dma.done [#allocation3], 256
    $region25: #{tpu_custom_call.1} parent=1 // pred_fallthru
      _
    // Predicated region
    $region26: #{tpu_custom_call.1} parent=1 // pred_check
      _
    $region27: #{tpu_custom_call.1} parent=1 // pred_check_branch
      %57 = sbr.rel (0) target = $region29
    $region28: #{tpu_custom_call.1} parent=1 // pred_region
      %58 = dma.done [#allocation6], 2048
    $region29: #{tpu_custom_call.1} parent=1 // pred_fallthru
      _
    // Predicated region
    $region30: #{tpu_custom_call.1} parent=1 // pred_check
      _
    $region31: #{tpu_custom_call.1} parent=1 // pred_check_branch
      %60 = sbr.rel (0) target = $region33
    $region32: #{tpu_custom_call.1} parent=1 // pred_region
      %61 = dma.done [#allocation6], 2048
    $region33: #{tpu_custom_call.1} parent=1 // pred_fallthru
      _
    %v62 = vld [vmem:[#allocation2] sm:$0xff]
    %v63 = vld [vmem:[#allocation2 + $0x8] sm:$0xff]
    %v64 = vld [vmem:[#allocation5] sm:$0xff]
    %v65 = vld [vmem:[#allocation5 + $0x8] sm:$0xff]
    %v66 = vld [vmem:[#allocation5 + $0x10] sm:$0xff]
    %v67 = vld [vmem:[#allocation5 + $0x18] sm:$0xff]
    %v68 = vld [vmem:[#allocation5 + $0x20] sm:$0xff]
    %v69 = vld [vmem:[#allocation5 + $0x28] sm:$0xff]
    %v70 = vld [vmem:[#allocation5 + $0x30] sm:$0xff]
    %v71 = vld [vmem:[#allocation5 + $0x38] sm:$0xff]
    %v72 = vld [vmem:[#allocation5 + $0x40] sm:$0xff]
    %v73 = vld [vmem:[#allocation5 + $0x48] sm:$0xff]
    %v74 = vld [vmem:[#allocation5 + $0x50] sm:$0xff]
    %v75 = vld [vmem:[#allocation5 + $0x58] sm:$0xff]
    %v76 = vld [vmem:[#allocation5 + $0x60] sm:$0xff]
    %v77 = vld [vmem:[#allocation5 + $0x68] sm:$0xff]
    %v78 = vld [vmem:[#allocation5 + $0x70] sm:$0xff]
    %v79 = vld [vmem:[#allocation5 + $0x78] sm:$0xff]
    %v80 = vld [vmem:[%s2] sm:$0x1]
    %v82 = vlaneseq
    %v83 = vshrl.u32 %v82, 7
    %v84 = vsub.s32 0, %v83
    %v85 = vrot.slane %v80, %v84
    %87 = vmatprep.subr.mxu0 0.0
    %v88 = vand.u32 %v79, 4294901760
    %89 = vmatpush1.msra.mxu0 %v88
    %90 = vmatprep.subr.mxu0 0.0
    %v91 = vand.u32 %v78, 4294901760
    %92 = vmatpush1.msra.mxu0 %v91
    %93 = vmatprep.subr.mxu0 0.0
    %v94 = vand.u32 %v77, 4294901760
    %95 = vmatpush1.msra.mxu0 %v94
    %96 = vmatprep.subr.mxu0 0.0
    %v97 = vand.u32 %v76, 4294901760
    %98 = vmatpush1.msra.mxu0 %v97
    %99 = vmatprep.subr.mxu0 0.0
    %v100 = vand.u32 %v75, 4294901760
    %101 = vmatpush1.msra.mxu0 %v100
    %102 = vmatprep.subr.mxu0 0.0
    %v103 = vand.u32 %v74, 4294901760
    %104 = vmatpush1.msra.mxu0 %v103
    %105 = vmatprep.subr.mxu0 0.0
    %v106 = vand.u32 %v73, 4294901760
    %107 = vmatpush1.msra.mxu0 %v106
    %108 = vmatprep.subr.mxu0 0.0
    %v109 = vand.u32 %v72, 4294901760
    %110 = vmatpush1.msra.mxu0 %v109
    %111 = vmatprep.subr.mxu0 0.0
    %v112 = vand.u32 %v71, 4294901760
    %113 = vmatpush1.msra.mxu0 %v112
    %114 = vmatprep.subr.mxu0 0.0
    %v115 = vand.u32 %v70, 4294901760
    %116 = vmatpush1.msra.mxu0 %v115
    %117 = vmatprep.subr.mxu0 0.0
    %v118 = vand.u32 %v69, 4294901760
    %119 = vmatpush1.msra.mxu0 %v118
    %120 = vmatprep.subr.mxu0 0.0
    %v121 = vand.u32 %v68, 4294901760
    %122 = vmatpush1.msra.mxu0 %v121
    %123 = vmatprep.subr.mxu0 0.0
    %v124 = vand.u32 %v67, 4294901760
    %125 = vmatpush1.msra.mxu0 %v124
    %126 = vmatprep.subr.mxu0 0.0
    %v127 = vand.u32 %v66, 4294901760
    %128 = vmatpush1.msra.mxu0 %v127
    %129 = vmatprep.subr.mxu0 0.0
    %v130 = vand.u32 %v65, 4294901760
    %131 = vmatpush1.msra.mxu0 %v130
    %132 = vmatprep.subr.mxu0 0.0
    %v133 = vand.u32 %v64, 4294901760
    %134 = vmatpush1.msra.mxu0 %v133
    %135 = vmatprep.subr.mxu0 0.0
    %136 = vmatpush2.msra.mxu0 0.0
    %137 = vmatprep.subr.mxu0 0.0
    %138 = vmatpush2.msra.mxu0 0.0
    %139 = vmatprep.subr.mxu0 0.0
    %140 = vmatpush2.msra.mxu0 0.0
    %141 = vmatprep.subr.mxu0 0.0
    %142 = vmatpush2.msra.mxu0 0.0
    %143 = vmatprep.subr.mxu0 0.0
    %144 = vmatpush2.msra.mxu0 0.0
    %145 = vmatprep.subr.mxu0 0.0
    %146 = vmatpush2.msra.mxu0 0.0
    %147 = vmatprep.subr.mxu0 0.0
    %148 = vmatpush2.msra.mxu0 0.0
    %149 = vmatprep.subr.mxu0 0.0
    %150 = vmatpush2.msra.mxu0 0.0
    %151 = vmatprep.subr.mxu0 0.0
    %152 = vmatpush2.msra.mxu0 0.0
    %153 = vmatprep.subr.mxu0 0.0
    %154 = vmatpush2.msra.mxu0 0.0
    %155 = vmatprep.subr.mxu0 0.0
    %156 = vmatpush2.msra.mxu0 0.0
    %157 = vmatprep.subr.mxu0 0.0
    %158 = vmatpush2.msra.mxu0 0.0
    %159 = vmatprep.subr.mxu0 0.0
    %160 = vmatpush2.msra.mxu0 0.0
    %161 = vmatprep.subr.mxu0 0.0
    %162 = vmatpush2.msra.mxu0 0.0
    %163 = vmatprep.subr.mxu0 0.0
    %164 = vmatpush2.msra.mxu0 0.0
    %165 = vmatprep.subr.mxu0 0.0
    %166 = vmatpush2.msra.mxu0 0.0
    %167 = vmatprep.mubr.f32.mxu0 0.0
    %v168 = vand.u32 %v62, 4294901760
    %v169 = vsub.f32 %v62, %v168
    %v170 = vand.u32 %v169, 4294901760
    %v171 = vsub.f32 %v169, %v170
    %v172 = vand.u32 %v171, 4294901760
    %173 = vmatmul.mubr.f32.gmra.mxu0 %v172
    %v174 = vpop.f32.mrf.mxu0
    %v175 = vadd.f32 %v85, %v174
    %v176 = vpop.f32.mrf.mxu0
    %177 = vmatprep.mubr.f32.mxu0 0.0
    %v178 = vand.u32 %v63, 4294901760
    %v179 = vsub.f32 %v63, %v178
    %v180 = vand.u32 %v179, 4294901760
    %v181 = vsub.f32 %v179, %v180
    %v182 = vand.u32 %v181, 4294901760
    %183 = vmatmul.mubr.f32.gmra.mxu0 %v182
    %v184 = vpop.f32.mrf.mxu0
    %v185 = vadd.f32 %v85, %v184
    %v186 = vpop.f32.mrf.mxu0
    %187 = vdwg.mxu0
    %188 = vmatprep.subr.mxu0 0.0
    %v189 = vand.u32 %v79, 4294901760
    %v190 = vsub.f32 %v79, %v189
    %v191 = vand.u32 %v190, 4294901760
    %v192 = vsub.f32 %v190, %v191
    %v193 = vand.u32 %v192, 4294901760
    %194 = vmatpush1.msra.mxu0 %v193
    %195 = vmatprep.subr.mxu0 0.0
    %v196 = vand.u32 %v78, 4294901760
    %v197 = vsub.f32 %v78, %v196
    %v198 = vand.u32 %v197, 4294901760
    %v199 = vsub.f32 %v197, %v198
    %v200 = vand.u32 %v199, 4294901760
    %201 = vmatpush1.msra.mxu0 %v200
    %202 = vmatprep.subr.mxu0 0.0
    %v203 = vand.u32 %v77, 4294901760
    %v204 = vsub.f32 %v77, %v203
    %v205 = vand.u32 %v204, 4294901760
    %v206 = vsub.f32 %v204, %v205
    %v207 = vand.u32 %v206, 4294901760
    %208 = vmatpush1.msra.mxu0 %v207
    %209 = vmatprep.subr.mxu0 0.0
    %v210 = vand.u32 %v76, 4294901760
    %v211 = vsub.f32 %v76, %v210
    %v212 = vand.u32 %v211, 4294901760
    %v213 = vsub.f32 %v211, %v212
    %v214 = vand.u32 %v213, 4294901760
    %215 = vmatpush1.msra.mxu0 %v214
    %216 = vmatprep.subr.mxu0 0.0
    %v217 = vand.u32 %v75, 4294901760
    %v218 = vsub.f32 %v75, %v217
    %v219 = vand.u32 %v218, 4294901760
    %v220 = vsub.f32 %v218, %v219
    %v221 = vand.u32 %v220, 4294901760
    %222 = vmatpush1.msra.mxu0 %v221
    %223 = vmatprep.subr.mxu0 0.0
    %v224 = vand.u32 %v74, 4294901760
    %v225 = vsub.f32 %v74, %v224
    %v226 = vand.u32 %v225, 4294901760
    %v227 = vsub.f32 %v225, %v226
    %v228 = vand.u32 %v227, 4294901760
    %229 = vmatpush1.msra.mxu0 %v228
    %230 = vmatprep.subr.mxu0 0.0
    %v231 = vand.u32 %v73, 4294901760
    %v232 = vsub.f32 %v73, %v231
    %v233 = vand.u32 %v232, 4294901760
    %v234 = vsub.f32 %v232, %v233
    %v235 = vand.u32 %v234, 4294901760
    %236 = vmatpush1.msra.mxu0 %v235
    %237 = vmatprep.subr.mxu0 0.0
    %v238 = vand.u32 %v72, 4294901760
    %v239 = vsub.f32 %v72, %v238
    %v240 = vand.u32 %v239, 4294901760
    %v241 = vsub.f32 %v239, %v240
    %v242 = vand.u32 %v241, 4294901760
    %243 = vmatpush1.msra.mxu0 %v242
    %244 = vmatprep.subr.mxu0 0.0
    %v245 = vand.u32 %v71, 4294901760
    %v246 = vsub.f32 %v71, %v245
    %v247 = vand.u32 %v246, 4294901760
    %v248 = vsub.f32 %v246, %v247
    %v249 = vand.u32 %v248, 4294901760
    %250 = vmatpush1.msra.mxu0 %v249
    %251 = vmatprep.subr.mxu0 0.0
    %v252 = vand.u32 %v70, 4294901760
    %v253 = vsub.f32 %v70, %v252
    %v254 = vand.u32 %v253, 4294901760
    %v255 = vsub.f32 %v253, %v254
    %v256 = vand.u32 %v255, 4294901760
    %257 = vmatpush1.msra.mxu0 %v256
    %258 = vmatprep.subr.mxu0 0.0
    %v259 = vand.u32 %v69, 4294901760
    %v260 = vsub.f32 %v69, %v259
    %v261 = vand.u32 %v260, 4294901760
    %v262 = vsub.f32 %v260, %v261
    %v263 = vand.u32 %v262, 4294901760
    %264 = vmatpush1.msra.mxu0 %v263
    %265 = vmatprep.subr.mxu0 0.0
    %v266 = vand.u32 %v68, 4294901760
    %v267 = vsub.f32 %v68, %v266
    %v268 = vand.u32 %v267, 4294901760
    %v269 = vsub.f32 %v267, %v268
    %v270 = vand.u32 %v269, 4294901760
    %271 = vmatpush1.msra.mxu0 %v270
    %272 = vmatprep.subr.mxu0 0.0
    %v273 = vand.u32 %v67, 4294901760
    %v274 = vsub.f32 %v67, %v273
    %v275 = vand.u32 %v274, 4294901760
    %v276 = vsub.f32 %v274, %v275
    %v277 = vand.u32 %v276, 4294901760
    %278 = vmatpush1.msra.mxu0 %v277
    %279 = vmatprep.subr.mxu0 0.0
    %v280 = vand.u32 %v66, 4294901760
    %v281 = vsub.f32 %v66, %v280
    %v282 = vand.u32 %v281, 4294901760
    %v283 = vsub.f32 %v281, %v282
    %v284 = vand.u32 %v283, 4294901760
    %285 = vmatpush1.msra.mxu0 %v284
    %286 = vmatprep.subr.mxu0 0.0
    %v287 = vand.u32 %v65, 4294901760
    %v288 = vsub.f32 %v65, %v287
    %v289 = vand.u32 %v288, 4294901760
    %v290 = vsub.f32 %v288, %v289
    %v291 = vand.u32 %v290, 4294901760
    %292 = vmatpush1.msra.mxu0 %v291
    %293 = vmatprep.subr.mxu0 0.0
    %v294 = vand.u32 %v64, 4294901760
    %v295 = vsub.f32 %v64, %v294
    %v296 = vand.u32 %v295, 4294901760
    %v297 = vsub.f32 %v295, %v296
    %v298 = vand.u32 %v297, 4294901760
    %299 = vmatpush1.msra.mxu0 %v298
    %300 = vmatprep.subr.mxu0 0.0
    %301 = vmatpush2.msra.mxu0 0.0
    %302 = vmatprep.subr.mxu0 0.0
    %303 = vmatpush2.msra.mxu0 0.0
    %304 = vmatprep.subr.mxu0 0.0
    %305 = vmatpush2.msra.mxu0 0.0
    %306 = vmatprep.subr.mxu0 0.0
    %307 = vmatpush2.msra.mxu0 0.0
    %308 = vmatprep.subr.mxu0 0.0
    %309 = vmatpush2.msra.mxu0 0.0
    %310 = vmatprep.subr.mxu0 0.0
    %311 = vmatpush2.msra.mxu0 0.0
    %312 = vmatprep.subr.mxu0 0.0
    %313 = vmatpush2.msra.mxu0 0.0
    %314 = vmatprep.subr.mxu0 0.0
    %315 = vmatpush2.msra.mxu0 0.0
    %316 = vmatprep.subr.mxu0 0.0
    %317 = vmatpush2.msra.mxu0 0.0
    %318 = vmatprep.subr.mxu0 0.0
    %319 = vmatpush2.msra.mxu0 0.0
    %320 = vmatprep.subr.mxu0 0.0
    %321 = vmatpush2.msra.mxu0 0.0
    %322 = vmatprep.subr.mxu0 0.0
    %323 = vmatpush2.msra.mxu0 0.0
    %324 = vmatprep.subr.mxu0 0.0
    %325 = vmatpush2.msra.mxu0 0.0
    %326 = vmatprep.subr.mxu0 0.0
    %327 = vmatpush2.msra.mxu0 0.0
    %328 = vmatprep.subr.mxu0 0.0
    %329 = vmatpush2.msra.mxu0 0.0
    %330 = vmatprep.subr.mxu0 0.0
    %331 = vmatpush2.msra.mxu0 0.0
    %332 = vmatprep.mubr.f32.mxu0 0.0
    %v333 = vand.u32 %v62, 4294901760
    %334 = vmatmul.mubr.f32.gmra.mxu0 %v333
    %v335 = vpop.f32.mrf.mxu0
    %v336 = vadd.f32 %v175, %v335
    %v337 = vpop.f32.mrf.mxu0
    %338 = vmatprep.mubr.f32.mxu0 0.0
    %v339 = vand.u32 %v63, 4294901760
    %340 = vmatmul.mubr.f32.gmra.mxu0 %v339
    %v341 = vpop.f32.mrf.mxu0
    %v342 = vadd.f32 %v185, %v341
    %v343 = vpop.f32.mrf.mxu0
    %344 = vdwg.mxu0
    %345 = vmatprep.subr.mxu0 0.0
    %v346 = vand.u32 %v79, 4294901760
    %v347 = vsub.f32 %v79, %v346
    %348 = vmatpush1.msra.mxu0 %v347
    %349 = vmatprep.subr.mxu0 0.0
    %v350 = vand.u32 %v78, 4294901760
    %v351 = vsub.f32 %v78, %v350
    %352 = vmatpush1.msra.mxu0 %v351
    %353 = vmatprep.subr.mxu0 0.0
    %v354 = vand.u32 %v77, 4294901760
    %v355 = vsub.f32 %v77, %v354
    %356 = vmatpush1.msra.mxu0 %v355
    %357 = vmatprep.subr.mxu0 0.0
    %v358 = vand.u32 %v76, 4294901760
    %v359 = vsub.f32 %v76, %v358
    %360 = vmatpush1.msra.mxu0 %v359
    %361 = vmatprep.subr.mxu0 0.0
    %v362 = vand.u32 %v75, 4294901760
    %v363 = vsub.f32 %v75, %v362
    %364 = vmatpush1.msra.mxu0 %v363
    %365 = vmatprep.subr.mxu0 0.0
    %v366 = vand.u32 %v74, 4294901760
    %v367 = vsub.f32 %v74, %v366
    %368 = vmatpush1.msra.mxu0 %v367
    %369 = vmatprep.subr.mxu0 0.0
    %v370 = vand.u32 %v73, 4294901760
    %v371 = vsub.f32 %v73, %v370
    %372 = vmatpush1.msra.mxu0 %v371
    %373 = vmatprep.subr.mxu0 0.0
    %v374 = vand.u32 %v72, 4294901760
    %v375 = vsub.f32 %v72, %v374
    %376 = vmatpush1.msra.mxu0 %v375
    %377 = vmatprep.subr.mxu0 0.0
    %v378 = vand.u32 %v71, 4294901760
    %v379 = vsub.f32 %v71, %v378
    %380 = vmatpush1.msra.mxu0 %v379
    %381 = vmatprep.subr.mxu0 0.0
    %v382 = vand.u32 %v70, 4294901760
    %v383 = vsub.f32 %v70, %v382
    %384 = vmatpush1.msra.mxu0 %v383
    %385 = vmatprep.subr.mxu0 0.0
    %v386 = vand.u32 %v69, 4294901760
    %v387 = vsub.f32 %v69, %v386
    %388 = vmatpush1.msra.mxu0 %v387
    %389 = vmatprep.subr.mxu0 0.0
    %v390 = vand.u32 %v68, 4294901760
    %v391 = vsub.f32 %v68, %v390
    %392 = vmatpush1.msra.mxu0 %v391
    %393 = vmatprep.subr.mxu0 0.0
    %v394 = vand.u32 %v67, 4294901760
    %v395 = vsub.f32 %v67, %v394
    %396 = vmatpush1.msra.mxu0 %v395
    %397 = vmatprep.subr.mxu0 0.0
    %v398 = vand.u32 %v66, 4294901760
    %v399 = vsub.f32 %v66, %v398
    %400 = vmatpush1.msra.mxu0 %v399
    %401 = vmatprep.subr.mxu0 0.0
    %v402 = vand.u32 %v65, 4294901760
    %v403 = vsub.f32 %v65, %v402
    %404 = vmatpush1.msra.mxu0 %v403
    %405 = vmatprep.subr.mxu0 0.0
    %v406 = vand.u32 %v64, 4294901760
    %v407 = vsub.f32 %v64, %v406
    %408 = vmatpush1.msra.mxu0 %v407
    %409 = vmatprep.subr.mxu0 0.0
    %410 = vmatpush2.msra.mxu0 0.0
    %411 = vmatprep.subr.mxu0 0.0
    %412 = vmatpush2.msra.mxu0 0.0
    %413 = vmatprep.subr.mxu0 0.0
    %414 = vmatpush2.msra.mxu0 0.0
    %415 = vmatprep.subr.mxu0 0.0
    %416 = vmatpush2.msra.mxu0 0.0
    %417 = vmatprep.subr.mxu0 0.0
    %418 = vmatpush2.msra.mxu0 0.0
    %419 = vmatprep.subr.mxu0 0.0
    %420 = vmatpush2.msra.mxu0 0.0
    %421 = vmatprep.subr.mxu0 0.0
    %422 = vmatpush2.msra.mxu0 0.0
    %423 = vmatprep.subr.mxu0 0.0
    %424 = vmatpush2.msra.mxu0 0.0
    %425 = vmatprep.subr.mxu0 0.0
    %426 = vmatpush2.msra.mxu0 0.0
    %427 = vmatprep.subr.mxu0 0.0
    %428 = vmatpush2.msra.mxu0 0.0
    %429 = vmatprep.subr.mxu0 0.0
    %430 = vmatpush2.msra.mxu0 0.0
    %431 = vmatprep.subr.mxu0 0.0
    %432 = vmatpush2.msra.mxu0 0.0
    %433 = vmatprep.subr.mxu0 0.0
    %434 = vmatpush2.msra.mxu0 0.0
    %435 = vmatprep.subr.mxu0 0.0
    %436 = vmatpush2.msra.mxu0 0.0
    %437 = vmatprep.subr.mxu0 0.0
    %438 = vmatpush2.msra.mxu0 0.0
    %439 = vmatprep.subr.mxu0 0.0
    %440 = vmatpush2.msra.mxu0 0.0
    %441 = vmatprep.mubr.f32.mxu0 0.0
    %v442 = vand.u32 %v62, 4294901760
    %v443 = vsub.f32 %v62, %v442
    %444 = vmatmul.mubr.f32.gmra.mxu0 %v443
    %v445 = vpop.f32.mrf.mxu0
    %v446 = vadd.f32 %v336, %v445
    %v447 = vpop.f32.mrf.mxu0
    %448 = vmatprep.mubr.f32.mxu0 0.0
    %v449 = vand.u32 %v63, 4294901760
    %v450 = vsub.f32 %v63, %v449
    %451 = vmatmul.mubr.f32.gmra.mxu0 %v450
    %v452 = vpop.f32.mrf.mxu0
    %v453 = vadd.f32 %v342, %v452
    %v454 = vpop.f32.mrf.mxu0
    %455 = vdwg.mxu0
    %456 = vmatprep.subr.mxu0 0.0
    %v457 = vand.u32 %v79, 4294901760
    %458 = vmatpush1.msra.mxu0 %v457
    %459 = vmatprep.subr.mxu0 0.0
    %v460 = vand.u32 %v78, 4294901760
    %461 = vmatpush1.msra.mxu0 %v460
    %462 = vmatprep.subr.mxu0 0.0
    %v463 = vand.u32 %v77, 4294901760
    %464 = vmatpush1.msra.mxu0 %v463
    %465 = vmatprep.subr.mxu0 0.0
    %v466 = vand.u32 %v76, 4294901760
    %467 = vmatpush1.msra.mxu0 %v466
    %468 = vmatprep.subr.mxu0 0.0
    %v469 = vand.u32 %v75, 4294901760
    %470 = vmatpush1.msra.mxu0 %v469
    %471 = vmatprep.subr.mxu0 0.0
    %v472 = vand.u32 %v74, 4294901760
    %473 = vmatpush1.msra.mxu0 %v472
    %474 = vmatprep.subr.mxu0 0.0
    %v475 = vand.u32 %v73, 4294901760
    %476 = vmatpush1.msra.mxu0 %v475
    %477 = vmatprep.subr.mxu0 0.0
    %v478 = vand.u32 %v72, 4294901760
    %479 = vmatpush1.msra.mxu0 %v478
    %480 = vmatprep.subr.mxu0 0.0
    %v481 = vand.u32 %v71, 4294901760
    %482 = vmatpush1.msra.mxu0 %v481
    %483 = vmatprep.subr.mxu0 0.0
    %v484 = vand.u32 %v70, 4294901760
    %485 = vmatpush1.msra.mxu0 %v484
    %486 = vmatprep.subr.mxu0 0.0
    %v487 = vand.u32 %v69, 4294901760
    %488 = vmatpush1.msra.mxu0 %v487
    %489 = vmatprep.subr.mxu0 0.0
    %v490 = vand.u32 %v68, 4294901760
    %491 = vmatpush1.msra.mxu0 %v490
    %492 = vmatprep.subr.mxu0 0.0
    %v493 = vand.u32 %v67, 4294901760
    %494 = vmatpush1.msra.mxu0 %v493
    %495 = vmatprep.subr.mxu0 0.0
    %v496 = vand.u32 %v66, 4294901760
    %497 = vmatpush1.msra.mxu0 %v496
    %498 = vmatprep.subr.mxu0 0.0
    %v499 = vand.u32 %v65, 4294901760
    %500 = vmatpush1.msra.mxu0 %v499
    %501 = vmatprep.subr.mxu0 0.0
    %v502 = vand.u32 %v64, 4294901760
    %503 = vmatpush1.msra.mxu0 %v502
    %504 = vmatprep.subr.mxu0 0.0
    %505 = vmatpush2.msra.mxu0 0.0
    %506 = vmatprep.subr.mxu0 0.0
    %507 = vmatpush2.msra.mxu0 0.0
    %508 = vmatprep.subr.mxu0 0.0
    %509 = vmatpush2.msra.mxu0 0.0
    %510 = vmatprep.subr.mxu0 0.0
    %511 = vmatpush2.msra.mxu0 0.0
    %512 = vmatprep.subr.mxu0 0.0
    %513 = vmatpush2.msra.mxu0 0.0
    %514 = vmatprep.subr.mxu0 0.0
    %515 = vmatpush2.msra.mxu0 0.0
    %516 = vmatprep.subr.mxu0 0.0
    %517 = vmatpush2.msra.mxu0 0.0
    %518 = vmatprep.subr.mxu0 0.0
    %519 = vmatpush2.msra.mxu0 0.0
    %520 = vmatprep.subr.mxu0 0.0
    %521 = vmatpush2.msra.mxu0 0.0
    %522 = vmatprep.subr.mxu0 0.0
    %523 = vmatpush2.msra.mxu0 0.0
    %524 = vmatprep.subr.mxu0 0.0
    %525 = vmatpush2.msra.mxu0 0.0
    %526 = vmatprep.subr.mxu0 0.0
    %527 = vmatpush2.msra.mxu0 0.0
    %528 = vmatprep.subr.mxu0 0.0
    %529 = vmatpush2.msra.mxu0 0.0
    %530 = vmatprep.subr.mxu0 0.0
    %531 = vmatpush2.msra.mxu0 0.0
    %532 = vmatprep.subr.mxu0 0.0
    %533 = vmatpush2.msra.mxu0 0.0
    %534 = vmatprep.subr.mxu0 0.0
    %535 = vmatpush2.msra.mxu0 0.0
    %536 = vmatprep.mubr.f32.mxu0 0.0
    %v537 = vand.u32 %v62, 4294901760
    %v538 = vsub.f32 %v62, %v537
    %v539 = vand.u32 %v538, 4294901760
    %540 = vmatmul.mubr.f32.gmra.mxu0 %v539
    %v541 = vpop.f32.mrf.mxu0
    %v542 = vadd.f32 %v446, %v541
    %v543 = vpop.f32.mrf.mxu0
    %544 = vmatprep.mubr.f32.mxu0 0.0
    %v545 = vand.u32 %v63, 4294901760
    %v546 = vsub.f32 %v63, %v545
    %v547 = vand.u32 %v546, 4294901760
    %548 = vmatmul.mubr.f32.gmra.mxu0 %v547
    %v549 = vpop.f32.mrf.mxu0
    %v550 = vadd.f32 %v453, %v549
    %v551 = vpop.f32.mrf.mxu0
    %552 = vdwg.mxu0
    %553 = vmatprep.subr.mxu0 0.0
    %v554 = vand.u32 %v79, 4294901760
    %v555 = vsub.f32 %v79, %v554
    %v556 = vand.u32 %v555, 4294901760
    %557 = vmatpush1.msra.mxu0 %v556
    %558 = vmatprep.subr.mxu0 0.0
    %v559 = vand.u32 %v78, 4294901760
    %v560 = vsub.f32 %v78, %v559
    %v561 = vand.u32 %v560, 4294901760
    %562 = vmatpush1.msra.mxu0 %v561
    %563 = vmatprep.subr.mxu0 0.0
    %v564 = vand.u32 %v77, 4294901760
    %v565 = vsub.f32 %v77, %v564
    %v566 = vand.u32 %v565, 4294901760
    %567 = vmatpush1.msra.mxu0 %v566
    %568 = vmatprep.subr.mxu0 0.0
    %v569 = vand.u32 %v76, 4294901760
    %v570 = vsub.f32 %v76, %v569
    %v571 = vand.u32 %v570, 4294901760
    %572 = vmatpush1.msra.mxu0 %v571
    %573 = vmatprep.subr.mxu0 0.0
    %v574 = vand.u32 %v75, 4294901760
    %v575 = vsub.f32 %v75, %v574
    %v576 = vand.u32 %v575, 4294901760
    %577 = vmatpush1.msra.mxu0 %v576
    %578 = vmatprep.subr.mxu0 0.0
    %v579 = vand.u32 %v74, 4294901760
    %v580 = vsub.f32 %v74, %v579
    %v581 = vand.u32 %v580, 4294901760
    %582 = vmatpush1.msra.mxu0 %v581
    %583 = vmatprep.subr.mxu0 0.0
    %v584 = vand.u32 %v73, 4294901760
    %v585 = vsub.f32 %v73, %v584
    %v586 = vand.u32 %v585, 4294901760
    %587 = vmatpush1.msra.mxu0 %v586
    %588 = vmatprep.subr.mxu0 0.0
    %v589 = vand.u32 %v72, 4294901760
    %v590 = vsub.f32 %v72, %v589
    %v591 = vand.u32 %v590, 4294901760
    %592 = vmatpush1.msra.mxu0 %v591
    %593 = vmatprep.subr.mxu0 0.0
    %v594 = vand.u32 %v71, 4294901760
    %v595 = vsub.f32 %v71, %v594
    %v596 = vand.u32 %v595, 4294901760
    %597 = vmatpush1.msra.mxu0 %v596
    %598 = vmatprep.subr.mxu0 0.0
    %v599 = vand.u32 %v70, 4294901760
    %v600 = vsub.f32 %v70, %v599
    %v601 = vand.u32 %v600, 4294901760
    %602 = vmatpush1.msra.mxu0 %v601
    %603 = vmatprep.subr.mxu0 0.0
    %v604 = vand.u32 %v69, 4294901760
    %v605 = vsub.f32 %v69, %v604
    %v606 = vand.u32 %v605, 4294901760
    %607 = vmatpush1.msra.mxu0 %v606
    %608 = vmatprep.subr.mxu0 0.0
    %v609 = vand.u32 %v68, 4294901760
    %v610 = vsub.f32 %v68, %v609
    %v611 = vand.u32 %v610, 4294901760
    %612 = vmatpush1.msra.mxu0 %v611
    %613 = vmatprep.subr.mxu0 0.0
    %v614 = vand.u32 %v67, 4294901760
    %v615 = vsub.f32 %v67, %v614
    %v616 = vand.u32 %v615, 4294901760
    %617 = vmatpush1.msra.mxu0 %v616
    %618 = vmatprep.subr.mxu0 0.0
    %v619 = vand.u32 %v66, 4294901760
    %v620 = vsub.f32 %v66, %v619
    %v621 = vand.u32 %v620, 4294901760
    %622 = vmatpush1.msra.mxu0 %v621
    %623 = vmatprep.subr.mxu0 0.0
    %v624 = vand.u32 %v65, 4294901760
    %v625 = vsub.f32 %v65, %v624
    %v626 = vand.u32 %v625, 4294901760
    %627 = vmatpush1.msra.mxu0 %v626
    %628 = vmatprep.subr.mxu0 0.0
    %v629 = vand.u32 %v64, 4294901760
    %v630 = vsub.f32 %v64, %v629
    %v631 = vand.u32 %v630, 4294901760
    %632 = vmatpush1.msra.mxu0 %v631
    %633 = vmatprep.subr.mxu0 0.0
    %634 = vmatpush2.msra.mxu0 0.0
    %635 = vmatprep.subr.mxu0 0.0
    %636 = vmatpush2.msra.mxu0 0.0
    %637 = vmatprep.subr.mxu0 0.0
    %638 = vmatpush2.msra.mxu0 0.0
    %639 = vmatprep.subr.mxu0 0.0
    %640 = vmatpush2.msra.mxu0 0.0
    %641 = vmatprep.subr.mxu0 0.0
    %642 = vmatpush2.msra.mxu0 0.0
    %643 = vmatprep.subr.mxu0 0.0
    %644 = vmatpush2.msra.mxu0 0.0
    %645 = vmatprep.subr.mxu0 0.0
    %646 = vmatpush2.msra.mxu0 0.0
    %647 = vmatprep.subr.mxu0 0.0
    %648 = vmatpush2.msra.mxu0 0.0
    %649 = vmatprep.subr.mxu0 0.0
    %650 = vmatpush2.msra.mxu0 0.0
    %651 = vmatprep.subr.mxu0 0.0
    %652 = vmatpush2.msra.mxu0 0.0
    %653 = vmatprep.subr.mxu0 0.0
    %654 = vmatpush2.msra.mxu0 0.0
    %655 = vmatprep.subr.mxu0 0.0
    %656 = vmatpush2.msra.mxu0 0.0
    %657 = vmatprep.subr.mxu0 0.0
    %658 = vmatpush2.msra.mxu0 0.0
    %659 = vmatprep.subr.mxu0 0.0
    %660 = vmatpush2.msra.mxu0 0.0
    %661 = vmatprep.subr.mxu0 0.0
    %662 = vmatpush2.msra.mxu0 0.0
    %663 = vmatprep.subr.mxu0 0.0
    %664 = vmatpush2.msra.mxu0 0.0
    %665 = vmatprep.mubr.f32.mxu0 0.0
    %v666 = vand.u32 %v62, 4294901760
    %667 = vmatmul.mubr.f32.gmra.mxu0 %v666
    %v668 = vpop.f32.mrf.mxu0
    %v669 = vadd.f32 %v542, %v668
    %v670 = vpop.f32.mrf.mxu0
    %671 = vmatprep.mubr.f32.mxu0 0.0
    %v672 = vand.u32 %v63, 4294901760
    %673 = vmatmul.mubr.f32.gmra.mxu0 %v672
    %v674 = vpop.f32.mrf.mxu0
    %v675 = vadd.f32 %v550, %v674
    %v676 = vpop.f32.mrf.mxu0
    %677 = vdwg.mxu0
    %678 = vmatprep.subr.mxu0 0.0
    %v679 = vand.u32 %v79, 4294901760
    %680 = vmatpush1.msra.mxu0 %v679
    %681 = vmatprep.subr.mxu0 0.0
    %v682 = vand.u32 %v78, 4294901760
    %683 = vmatpush1.msra.mxu0 %v682
    %684 = vmatprep.subr.mxu0 0.0
    %v685 = vand.u32 %v77, 4294901760
    %686 = vmatpush1.msra.mxu0 %v685
    %687 = vmatprep.subr.mxu0 0.0
    %v688 = vand.u32 %v76, 4294901760
    %689 = vmatpush1.msra.mxu0 %v688
    %690 = vmatprep.subr.mxu0 0.0
    %v691 = vand.u32 %v75, 4294901760
    %692 = vmatpush1.msra.mxu0 %v691
    %693 = vmatprep.subr.mxu0 0.0
    %v694 = vand.u32 %v74, 4294901760
    %695 = vmatpush1.msra.mxu0 %v694
    %696 = vmatprep.subr.mxu0 0.0
    %v697 = vand.u32 %v73, 4294901760
    %698 = vmatpush1.msra.mxu0 %v697
    %699 = vmatprep.subr.mxu0 0.0
    %v700 = vand.u32 %v72, 4294901760
    %701 = vmatpush1.msra.mxu0 %v700
    %702 = vmatprep.subr.mxu0 0.0
    %v703 = vand.u32 %v71, 4294901760
    %704 = vmatpush1.msra.mxu0 %v703
    %705 = vmatprep.subr.mxu0 0.0
    %v706 = vand.u32 %v70, 4294901760
    %707 = vmatpush1.msra.mxu0 %v706
    %708 = vmatprep.subr.mxu0 0.0
    %v709 = vand.u32 %v69, 4294901760
    %710 = vmatpush1.msra.mxu0 %v709
    %711 = vmatprep.subr.mxu0 0.0
    %v712 = vand.u32 %v68, 4294901760
    %713 = vmatpush1.msra.mxu0 %v712
    %714 = vmatprep.subr.mxu0 0.0
    %v715 = vand.u32 %v67, 4294901760
    %716 = vmatpush1.msra.mxu0 %v715
    %717 = vmatprep.subr.mxu0 0.0
    %v718 = vand.u32 %v66, 4294901760
    %719 = vmatpush1.msra.mxu0 %v718
    %720 = vmatprep.subr.mxu0 0.0
    %v721 = vand.u32 %v65, 4294901760
    %722 = vmatpush1.msra.mxu0 %v721
    %723 = vmatprep.subr.mxu0 0.0
    %v724 = vand.u32 %v64, 4294901760
    %725 = vmatpush1.msra.mxu0 %v724
    %726 = vmatprep.subr.mxu0 0.0
    %727 = vmatpush2.msra.mxu0 0.0
    %728 = vmatprep.subr.mxu0 0.0
    %729 = vmatpush2.msra.mxu0 0.0
    %730 = vmatprep.subr.mxu0 0.0
    %731 = vmatpush2.msra.mxu0 0.0
    %732 = vmatprep.subr.mxu0 0.0
    %733 = vmatpush2.msra.mxu0 0.0
    %734 = vmatprep.subr.mxu0 0.0
    %735 = vmatpush2.msra.mxu0 0.0
    %736 = vmatprep.subr.mxu0 0.0
    %737 = vmatpush2.msra.mxu0 0.0
    %738 = vmatprep.subr.mxu0 0.0
    %739 = vmatpush2.msra.mxu0 0.0
    %740 = vmatprep.subr.mxu0 0.0
    %741 = vmatpush2.msra.mxu0 0.0
    %742 = vmatprep.subr.mxu0 0.0
    %743 = vmatpush2.msra.mxu0 0.0
    %744 = vmatprep.subr.mxu0 0.0
    %745 = vmatpush2.msra.mxu0 0.0
    %746 = vmatprep.subr.mxu0 0.0
    %747 = vmatpush2.msra.mxu0 0.0
    %748 = vmatprep.subr.mxu0 0.0
    %749 = vmatpush2.msra.mxu0 0.0
    %750 = vmatprep.subr.mxu0 0.0
    %751 = vmatpush2.msra.mxu0 0.0
    %752 = vmatprep.subr.mxu0 0.0
    %753 = vmatpush2.msra.mxu0 0.0
    %754 = vmatprep.subr.mxu0 0.0
    %755 = vmatpush2.msra.mxu0 0.0
    %756 = vmatprep.subr.mxu0 0.0
    %757 = vmatpush2.msra.mxu0 0.0
    %758 = vmatprep.mubr.f32.mxu0 0.0
    %v759 = vand.u32 %v62, 4294901760
    %760 = vmatmul.mubr.f32.gmra.mxu0 %v759
    %v761 = vpop.f32.mrf.mxu0
    %v762 = vadd.f32 %v669, %v761
    %v763 = vpop.f32.mrf.mxu0
    %764 = vmatprep.mubr.f32.mxu0 0.0
    %v765 = vand.u32 %v63, 4294901760
    %766 = vmatmul.mubr.f32.gmra.mxu0 %v765
    %v767 = vpop.f32.mrf.mxu0
    %v768 = vadd.f32 %v675, %v767
    %v769 = vpop.f32.mrf.mxu0
    %770 = vdwg.mxu0
    %v771 = vmul.f32 %v762, 0.5
    %v772 = vmul.f32 %v768, 0.5
    %v773 = vmul.f32 %v762, 0.044715
    %v774 = vmul.f32 %v768, 0.044715
    %v775 = vmul.f32 %v773, %v762
    %v776 = vmul.f32 %v774, %v768
    %v777 = vmul.f32 %v775, %v762
    %v778 = vmul.f32 %v776, %v768
    %v779 = vadd.f32 %v762, %v777
    %v780 = vadd.f32 %v768, %v778
    %v781 = vmul.f32 %v779, 0.7978846
    %v782 = vmul.f32 %v780, 0.7978846
    %v783 = vtanh.pop %v781
    %v784 = vtanh.pop %v782
    %v785 = vadd.f32 %v783, 1.0
    %v786 = vadd.f32 %v784, 1.0
    %v787 = vmul.f32 %v771, %v785
    %v788 = vmul.f32 %v772, %v786
    %v789 = vld [vmem:[#allocation7] sm:$0xff]
    %v790 = vld [vmem:[#allocation7 + $0x8] sm:$0xff]
    %v791 = vld [vmem:[#allocation7 + $0x10] sm:$0xff]
    %v792 = vld [vmem:[#allocation7 + $0x18] sm:$0xff]
    %v793 = vld [vmem:[#allocation7 + $0x20] sm:$0xff]
    %v794 = vld [vmem:[#allocation7 + $0x28] sm:$0xff]
    %v795 = vld [vmem:[#allocation7 + $0x30] sm:$0xff]
    %v796 = vld [vmem:[#allocation7 + $0x38] sm:$0xff]
    %v797 = vld [vmem:[#allocation7 + $0x40] sm:$0xff]
    %v798 = vld [vmem:[#allocation7 + $0x48] sm:$0xff]
    %v799 = vld [vmem:[#allocation7 + $0x50] sm:$0xff]
    %v800 = vld [vmem:[#allocation7 + $0x58] sm:$0xff]
    %v801 = vld [vmem:[#allocation7 + $0x60] sm:$0xff]
    %v802 = vld [vmem:[#allocation7 + $0x68] sm:$0xff]
    %v803 = vld [vmem:[#allocation7 + $0x70] sm:$0xff]
    %v804 = vld [vmem:[#allocation7 + $0x78] sm:$0xff]
    %v805 = vld [vmem:[%s4] sm:$0x1]
    %v807 = vlaneseq
    %v808 = vshrl.u32 %v807, 7
    %v809 = vsub.s32 0, %v808
    %v810 = vrot.slane %v805, %v809
    %812 = vmatprep.subr.mxu0 0.0
    %v813 = vand.u32 %v804, 4294901760
    %814 = vmatpush1.msra.mxu0 %v813
    %815 = vmatprep.subr.mxu0 0.0
    %v816 = vand.u32 %v803, 4294901760
    %817 = vmatpush1.msra.mxu0 %v816
    %818 = vmatprep.subr.mxu0 0.0
    %v819 = vand.u32 %v802, 4294901760
    %820 = vmatpush1.msra.mxu0 %v819
    %821 = vmatprep.subr.mxu0 0.0
    %v822 = vand.u32 %v801, 4294901760
    %823 = vmatpush1.msra.mxu0 %v822
    %824 = vmatprep.subr.mxu0 0.0
    %v825 = vand.u32 %v800, 4294901760
    %826 = vmatpush1.msra.mxu0 %v825
    %827 = vmatprep.subr.mxu0 0.0
    %v828 = vand.u32 %v799, 4294901760
    %829 = vmatpush1.msra.mxu0 %v828
    %830 = vmatprep.subr.mxu0 0.0
    %v831 = vand.u32 %v798, 4294901760
    %832 = vmatpush1.msra.mxu0 %v831
    %833 = vmatprep.subr.mxu0 0.0
    %v834 = vand.u32 %v797, 4294901760
    %835 = vmatpush1.msra.mxu0 %v834
    %836 = vmatprep.subr.mxu0 0.0
    %v837 = vand.u32 %v796, 4294901760
    %838 = vmatpush1.msra.mxu0 %v837
    %839 = vmatprep.subr.mxu0 0.0
    %v840 = vand.u32 %v795, 4294901760
    %841 = vmatpush1.msra.mxu0 %v840
    %842 = vmatprep.subr.mxu0 0.0
    %v843 = vand.u32 %v794, 4294901760
    %844 = vmatpush1.msra.mxu0 %v843
    %845 = vmatprep.subr.mxu0 0.0
    %v846 = vand.u32 %v793, 4294901760
    %847 = vmatpush1.msra.mxu0 %v846
    %848 = vmatprep.subr.mxu0 0.0
    %v849 = vand.u32 %v792, 4294901760
    %850 = vmatpush1.msra.mxu0 %v849
    %851 = vmatprep.subr.mxu0 0.0
    %v852 = vand.u32 %v791, 4294901760
    %853 = vmatpush1.msra.mxu0 %v852
    %854 = vmatprep.subr.mxu0 0.0
    %v855 = vand.u32 %v790, 4294901760
    %856 = vmatpush1.msra.mxu0 %v855
    %857 = vmatprep.subr.mxu0 0.0
    %v858 = vand.u32 %v789, 4294901760
    %859 = vmatpush1.msra.mxu0 %v858
    %860 = vmatprep.subr.mxu0 0.0
    %861 = vmatpush2.msra.mxu0 0.0
    %862 = vmatprep.subr.mxu0 0.0
    %863 = vmatpush2.msra.mxu0 0.0
    %864 = vmatprep.subr.mxu0 0.0
    %865 = vmatpush2.msra.mxu0 0.0
    %866 = vmatprep.subr.mxu0 0.0
    %867 = vmatpush2.msra.mxu0 0.0
    %868 = vmatprep.subr.mxu0 0.0
    %869 = vmatpush2.msra.mxu0 0.0
    %870 = vmatprep.subr.mxu0 0.0
    %871 = vmatpush2.msra.mxu0 0.0
    %872 = vmatprep.subr.mxu0 0.0
    %873 = vmatpush2.msra.mxu0 0.0
    %874 = vmatprep.subr.mxu0 0.0
    %875 = vmatpush2.msra.mxu0 0.0
    %876 = vmatprep.subr.mxu0 0.0
    %877 = vmatpush2.msra.mxu0 0.0
    %878 = vmatprep.subr.mxu0 0.0
    %879 = vmatpush2.msra.mxu0 0.0
    %880 = vmatprep.subr.mxu0 0.0
    %881 = vmatpush2.msra.mxu0 0.0
    %882 = vmatprep.subr.mxu0 0.0
    %883 = vmatpush2.msra.mxu0 0.0
    %884 = vmatprep.subr.mxu0 0.0
    %885 = vmatpush2.msra.mxu0 0.0
    %886 = vmatprep.subr.mxu0 0.0
    %887 = vmatpush2.msra.mxu0 0.0
    %888 = vmatprep.subr.mxu0 0.0
    %889 = vmatpush2.msra.mxu0 0.0
    %890 = vmatprep.subr.mxu0 0.0
    %891 = vmatpush2.msra.mxu0 0.0
    %892 = vmatprep.mubr.f32.mxu0 0.0
    %v893 = vand.u32 %v787, 4294901760
    %v894 = vsub.f32 %v787, %v893
    %v895 = vand.u32 %v894, 4294901760
    %v896 = vsub.f32 %v894, %v895
    %v897 = vand.u32 %v896, 4294901760
    %898 = vmatmul.mubr.f32.gmra.mxu0 %v897
    %v899 = vpop.f32.mrf.mxu0
    %v900 = vadd.f32 %v810, %v899
    %v901 = vpop.f32.mrf.mxu0
    %902 = vmatprep.mubr.f32.mxu0 0.0
    %v903 = vand.u32 %v788, 4294901760
    %v904 = vsub.f32 %v788, %v903
    %v905 = vand.u32 %v904, 4294901760
    %v906 = vsub.f32 %v904, %v905
    %v907 = vand.u32 %v906, 4294901760
    %908 = vmatmul.mubr.f32.gmra.mxu0 %v907
    %v909 = vpop.f32.mrf.mxu0
    %v910 = vadd.f32 %v810, %v909
    %v911 = vpop.f32.mrf.mxu0
    %912 = vdwg.mxu0
    %913 = vmatprep.subr.mxu0 0.0
    %v914 = vand.u32 %v804, 4294901760
    %v915 = vsub.f32 %v804, %v914
    %v916 = vand.u32 %v915, 4294901760
    %v917 = vsub.f32 %v915, %v916
    %v918 = vand.u32 %v917, 4294901760
    %919 = vmatpush1.msra.mxu0 %v918
    %920 = vmatprep.subr.mxu0 0.0
    %v921 = vand.u32 %v803, 4294901760
    %v922 = vsub.f32 %v803, %v921
    %v923 = vand.u32 %v922, 4294901760
    %v924 = vsub.f32 %v922, %v923
    %v925 = vand.u32 %v924, 4294901760
    %926 = vmatpush1.msra.mxu0 %v925
    %927 = vmatprep.subr.mxu0 0.0
    %v928 = vand.u32 %v802, 4294901760
    %v929 = vsub.f32 %v802, %v928
    %v930 = vand.u32 %v929, 4294901760
    %v931 = vsub.f32 %v929, %v930
    %v932 = vand.u32 %v931, 4294901760
    %933 = vmatpush1.msra.mxu0 %v932
    %934 = vmatprep.subr.mxu0 0.0
    %v935 = vand.u32 %v801, 4294901760
    %v936 = vsub.f32 %v801, %v935
    %v937 = vand.u32 %v936, 4294901760
    %v938 = vsub.f32 %v936, %v937
    %v939 = vand.u32 %v938, 4294901760
    %940 = vmatpush1.msra.mxu0 %v939
    %941 = vmatprep.subr.mxu0 0.0
    %v942 = vand.u32 %v800, 4294901760
    %v943 = vsub.f32 %v800, %v942
    %v944 = vand.u32 %v943, 4294901760
    %v945 = vsub.f32 %v943, %v944
    %v946 = vand.u32 %v945, 4294901760
    %947 = vmatpush1.msra.mxu0 %v946
    %948 = vmatprep.subr.mxu0 0.0
    %v949 = vand.u32 %v799, 4294901760
    %v950 = vsub.f32 %v799, %v949
    %v951 = vand.u32 %v950, 4294901760
    %v952 = vsub.f32 %v950, %v951
    %v953 = vand.u32 %v952, 4294901760
    %954 = vmatpush1.msra.mxu0 %v953
    %955 = vmatprep.subr.mxu0 0.0
    %v956 = vand.u32 %v798, 4294901760
    %v957 = vsub.f32 %v798, %v956
    %v958 = vand.u32 %v957, 4294901760
    %v959 = vsub.f32 %v957, %v958
    %v960 = vand.u32 %v959, 4294901760
    %961 = vmatpush1.msra.mxu0 %v960
    %962 = vmatprep.subr.mxu0 0.0
    %v963 = vand.u32 %v797, 4294901760
    %v964 = vsub.f32 %v797, %v963
    %v965 = vand.u32 %v964, 4294901760
    %v966 = vsub.f32 %v964, %v965
    %v967 = vand.u32 %v966, 4294901760
    %968 = vmatpush1.msra.mxu0 %v967
    %969 = vmatprep.subr.mxu0 0.0
    %v970 = vand.u32 %v796, 4294901760
    %v971 = vsub.f32 %v796, %v970
    %v972 = vand.u32 %v971, 4294901760
    %v973 = vsub.f32 %v971, %v972
    %v974 = vand.u32 %v973, 4294901760
    %975 = vmatpush1.msra.mxu0 %v974
    %976 = vmatprep.subr.mxu0 0.0
    %v977 = vand.u32 %v795, 4294901760
    %v978 = vsub.f32 %v795, %v977
    %v979 = vand.u32 %v978, 4294901760
    %v980 = vsub.f32 %v978, %v979
    %v981 = vand.u32 %v980, 4294901760
    %982 = vmatpush1.msra.mxu0 %v981
    %983 = vmatprep.subr.mxu0 0.0
    %v984 = vand.u32 %v794, 4294901760
    %v985 = vsub.f32 %v794, %v984
    %v986 = vand.u32 %v985, 4294901760
    %v987 = vsub.f32 %v985, %v986
    %v988 = vand.u32 %v987, 4294901760
    %989 = vmatpush1.msra.mxu0 %v988
    %990 = vmatprep.subr.mxu0 0.0
    %v991 = vand.u32 %v793, 4294901760
    %v992 = vsub.f32 %v793, %v991
    %v993 = vand.u32 %v992, 4294901760
    %v994 = vsub.f32 %v992, %v993
    %v995 = vand.u32 %v994, 4294901760
    %996 = vmatpush1.msra.mxu0 %v995
    %997 = vmatprep.subr.mxu0 0.0
    %v998 = vand.u32 %v792, 4294901760
    %v999 = vsub.f32 %v792, %v998
    %v1000 = vand.u32 %v999, 4294901760
    %v1001 = vsub.f32 %v999, %v1000
    %v1002 = vand.u32 %v1001, 4294901760
    %1003 = vmatpush1.msra.mxu0 %v1002
    %1004 = vmatprep.subr.mxu0 0.0
    %v1005 = vand.u32 %v791, 4294901760
    %v1006 = vsub.f32 %v791, %v1005
    %v1007 = vand.u32 %v1006, 4294901760
    %v1008 = vsub.f32 %v1006, %v1007
    %v1009 = vand.u32 %v1008, 4294901760
    %1010 = vmatpush1.msra.mxu0 %v1009
    %1011 = vmatprep.subr.mxu0 0.0
    %v1012 = vand.u32 %v790, 4294901760
    %v1013 = vsub.f32 %v790, %v1012
    %v1014 = vand.u32 %v1013, 4294901760
    %v1015 = vsub.f32 %v1013, %v1014
    %v1016 = vand.u32 %v1015, 4294901760
    %1017 = vmatpush1.msra.mxu0 %v1016
    %1018 = vmatprep.subr.mxu0 0.0
    %v1019 = vand.u32 %v789, 4294901760
    %v1020 = vsub.f32 %v789, %v1019
    %v1021 = vand.u32 %v1020, 4294901760
    %v1022 = vsub.f32 %v1020, %v1021
    %v1023 = vand.u32 %v1022, 4294901760
    %1024 = vmatpush1.msra.mxu0 %v1023
    %1025 = vmatprep.subr.mxu0 0.0
    %1026 = vmatpush2.msra.mxu0 0.0
    %1027 = vmatprep.subr.mxu0 0.0
    %1028 = vmatpush2.msra.mxu0 0.0
    %1029 = vmatprep.subr.mxu0 0.0
    %1030 = vmatpush2.msra.mxu0 0.0
    %1031 = vmatprep.subr.mxu0 0.0
    %1032 = vmatpush2.msra.mxu0 0.0
    %1033 = vmatprep.subr.mxu0 0.0
    %1034 = vmatpush2.msra.mxu0 0.0
    %1035 = vmatprep.subr.mxu0 0.0
    %1036 = vmatpush2.msra.mxu0 0.0
    %1037 = vmatprep.subr.mxu0 0.0
    %1038 = vmatpush2.msra.mxu0 0.0
    %1039 = vmatprep.subr.mxu0 0.0
    %1040 = vmatpush2.msra.mxu0 0.0
    %1041 = vmatprep.subr.mxu0 0.0
    %1042 = vmatpush2.msra.mxu0 0.0
    %1043 = vmatprep.subr.mxu0 0.0
    %1044 = vmatpush2.msra.mxu0 0.0
    %1045 = vmatprep.subr.mxu0 0.0
    %1046 = vmatpush2.msra.mxu0 0.0
    %1047 = vmatprep.subr.mxu0 0.0
    %1048 = vmatpush2.msra.mxu0 0.0
    %1049 = vmatprep.subr.mxu0 0.0
    %1050 = vmatpush2.msra.mxu0 0.0
    %1051 = vmatprep.subr.mxu0 0.0
    %1052 = vmatpush2.msra.mxu0 0.0
    %1053 = vmatprep.subr.mxu0 0.0
    %1054 = vmatpush2.msra.mxu0 0.0
    %1055 = vmatprep.subr.mxu0 0.0
    %1056 = vmatpush2.msra.mxu0 0.0
    %1057 = vmatprep.mubr.f32.mxu0 0.0
    %v1058 = vand.u32 %v787, 4294901760
    %1059 = vmatmul.mubr.f32.gmra.mxu0 %v1058
    %v1060 = vpop.f32.mrf.mxu0
    %v1061 = vadd.f32 %v900, %v1060
    %v1062 = vpop.f32.mrf.mxu0
    %1063 = vmatprep.mubr.f32.mxu0 0.0
    %v1064 = vand.u32 %v788, 4294901760
    %1065 = vmatmul.mubr.f32.gmra.mxu0 %v1064
    %v1066 = vpop.f32.mrf.mxu0
    %v1067 = vadd.f32 %v910, %v1066
    %v1068 = vpop.f32.mrf.mxu0
    %1069 = vdwg.mxu0
    %1070 = vmatprep.subr.mxu0 0.0
    %v1071 = vand.u32 %v804, 4294901760
    %v1072 = vsub.f32 %v804, %v1071
    %1073 = vmatpush1.msra.mxu0 %v1072
    %1074 = vmatprep.subr.mxu0 0.0
    %v1075 = vand.u32 %v803, 4294901760
    %v1076 = vsub.f32 %v803, %v1075
    %1077 = vmatpush1.msra.mxu0 %v1076
    %1078 = vmatprep.subr.mxu0 0.0
    %v1079 = vand.u32 %v802, 4294901760
    %v1080 = vsub.f32 %v802, %v1079
    %1081 = vmatpush1.msra.mxu0 %v1080
    %1082 = vmatprep.subr.mxu0 0.0
    %v1083 = vand.u32 %v801, 4294901760
    %v1084 = vsub.f32 %v801, %v1083
    %1085 = vmatpush1.msra.mxu0 %v1084
    %1086 = vmatprep.subr.mxu0 0.0
    %v1087 = vand.u32 %v800, 4294901760
    %v1088 = vsub.f32 %v800, %v1087
    %1089 = vmatpush1.msra.mxu0 %v1088
    %1090 = vmatprep.subr.mxu0 0.0
    %v1091 = vand.u32 %v799, 4294901760
    %v1092 = vsub.f32 %v799, %v1091
    %1093 = vmatpush1.msra.mxu0 %v1092
    %1094 = vmatprep.subr.mxu0 0.0
    %v1095 = vand.u32 %v798, 4294901760
    %v1096 = vsub.f32 %v798, %v1095
    %1097 = vmatpush1.msra.mxu0 %v1096
    %1098 = vmatprep.subr.mxu0 0.0
    %v1099 = vand.u32 %v797, 4294901760
    %v1100 = vsub.f32 %v797, %v1099
    %1101 = vmatpush1.msra.mxu0 %v1100
    %1102 = vmatprep.subr.mxu0 0.0
    %v1103 = vand.u32 %v796, 4294901760
    %v1104 = vsub.f32 %v796, %v1103
    %1105 = vmatpush1.msra.mxu0 %v1104
    %1106 = vmatprep.subr.mxu0 0.0
    %v1107 = vand.u32 %v795, 4294901760
    %v1108 = vsub.f32 %v795, %v1107
    %1109 = vmatpush1.msra.mxu0 %v1108
    %1110 = vmatprep.subr.mxu0 0.0
    %v1111 = vand.u32 %v794, 4294901760
    %v1112 = vsub.f32 %v794, %v1111
    %1113 = vmatpush1.msra.mxu0 %v1112
    %1114 = vmatprep.subr.mxu0 0.0
    %v1115 = vand.u32 %v793, 4294901760
    %v1116 = vsub.f32 %v793, %v1115
    %1117 = vmatpush1.msra.mxu0 %v1116
    %1118 = vmatprep.subr.mxu0 0.0
    %v1119 = vand.u32 %v792, 4294901760
    %v1120 = vsub.f32 %v792, %v1119
    %1121 = vmatpush1.msra.mxu0 %v1120
    %1122 = vmatprep.subr.mxu0 0.0
    %v1123 = vand.u32 %v791, 4294901760
    %v1124 = vsub.f32 %v791, %v1123
    %1125 = vmatpush1.msra.mxu0 %v1124
    %1126 = vmatprep.subr.mxu0 0.0
    %v1127 = vand.u32 %v790, 4294901760
    %v1128 = vsub.f32 %v790, %v1127
    %1129 = vmatpush1.msra.mxu0 %v1128
    %1130 = vmatprep.subr.mxu0 0.0
    %v1131 = vand.u32 %v789, 4294901760
    %v1132 = vsub.f32 %v789, %v1131
    %1133 = vmatpush1.msra.mxu0 %v1132
    %1134 = vmatprep.subr.mxu0 0.0
    %1135 = vmatpush2.msra.mxu0 0.0
    %1136 = vmatprep.subr.mxu0 0.0
    %1137 = vmatpush2.msra.mxu0 0.0
    %1138 = vmatprep.subr.mxu0 0.0
    %1139 = vmatpush2.msra.mxu0 0.0
    %1140 = vmatprep.subr.mxu0 0.0
    %1141 = vmatpush2.msra.mxu0 0.0
    %1142 = vmatprep.subr.mxu0 0.0
    %1143 = vmatpush2.msra.mxu0 0.0
    %1144 = vmatprep.subr.mxu0 0.0
    %1145 = vmatpush2.msra.mxu0 0.0
    %1146 = vmatprep.subr.mxu0 0.0
    %1147 = vmatpush2.msra.mxu0 0.0
    %1148 = vmatprep.subr.mxu0 0.0
    %1149 = vmatpush2.msra.mxu0 0.0
    %1150 = vmatprep.subr.mxu0 0.0
    %1151 = vmatpush2.msra.mxu0 0.0
    %1152 = vmatprep.subr.mxu0 0.0
    %1153 = vmatpush2.msra.mxu0 0.0
    %1154 = vmatprep.subr.mxu0 0.0
    %1155 = vmatpush2.msra.mxu0 0.0
    %1156 = vmatprep.subr.mxu0 0.0
    %1157 = vmatpush2.msra.mxu0 0.0
    %1158 = vmatprep.subr.mxu0 0.0
    %1159 = vmatpush2.msra.mxu0 0.0
    %1160 = vmatprep.subr.mxu0 0.0
    %1161 = vmatpush2.msra.mxu0 0.0
    %1162 = vmatprep.subr.mxu0 0.0
    %1163 = vmatpush2.msra.mxu0 0.0
    %1164 = vmatprep.subr.mxu0 0.0
    %1165 = vmatpush2.msra.mxu0 0.0
    %1166 = vmatprep.mubr.f32.mxu0 0.0
    %v1167 = vand.u32 %v787, 4294901760
    %v1168 = vsub.f32 %v787, %v1167
    %1169 = vmatmul.mubr.f32.gmra.mxu0 %v1168
    %v1170 = vpop.f32.mrf.mxu0
    %v1171 = vadd.f32 %v1061, %v1170
    %v1172 = vpop.f32.mrf.mxu0
    %1173 = vmatprep.mubr.f32.mxu0 0.0
    %v1174 = vand.u32 %v788, 4294901760
    %v1175 = vsub.f32 %v788, %v1174
    %1176 = vmatmul.mubr.f32.gmra.mxu0 %v1175
    %v1177 = vpop.f32.mrf.mxu0
    %v1178 = vadd.f32 %v1067, %v1177
    %v1179 = vpop.f32.mrf.mxu0
    %1180 = vdwg.mxu0
    %1181 = vmatprep.subr.mxu0 0.0
    %v1182 = vand.u32 %v804, 4294901760
    %1183 = vmatpush1.msra.mxu0 %v1182
    %1184 = vmatprep.subr.mxu0 0.0
    %v1185 = vand.u32 %v803, 4294901760
    %1186 = vmatpush1.msra.mxu0 %v1185
    %1187 = vmatprep.subr.mxu0 0.0
    %v1188 = vand.u32 %v802, 4294901760
    %1189 = vmatpush1.msra.mxu0 %v1188
    %1190 = vmatprep.subr.mxu0 0.0
    %v1191 = vand.u32 %v801, 4294901760
    %1192 = vmatpush1.msra.mxu0 %v1191
    %1193 = vmatprep.subr.mxu0 0.0
    %v1194 = vand.u32 %v800, 4294901760
    %1195 = vmatpush1.msra.mxu0 %v1194
    %1196 = vmatprep.subr.mxu0 0.0
    %v1197 = vand.u32 %v799, 4294901760
    %1198 = vmatpush1.msra.mxu0 %v1197
    %1199 = vmatprep.subr.mxu0 0.0
    %v1200 = vand.u32 %v798, 4294901760
    %1201 = vmatpush1.msra.mxu0 %v1200
    %1202 = vmatprep.subr.mxu0 0.0
    %v1203 = vand.u32 %v797, 4294901760
    %1204 = vmatpush1.msra.mxu0 %v1203
    %1205 = vmatprep.subr.mxu0 0.0
    %v1206 = vand.u32 %v796, 4294901760
    %1207 = vmatpush1.msra.mxu0 %v1206
    %1208 = vmatprep.subr.mxu0 0.0
    %v1209 = vand.u32 %v795, 4294901760
    %1210 = vmatpush1.msra.mxu0 %v1209
    %1211 = vmatprep.subr.mxu0 0.0
    %v1212 = vand.u32 %v794, 4294901760
    %1213 = vmatpush1.msra.mxu0 %v1212
    %1214 = vmatprep.subr.mxu0 0.0
    %v1215 = vand.u32 %v793, 4294901760
    %1216 = vmatpush1.msra.mxu0 %v1215
    %1217 = vmatprep.subr.mxu0 0.0
    %v1218 = vand.u32 %v792, 4294901760
    %1219 = vmatpush1.msra.mxu0 %v1218
    %1220 = vmatprep.subr.mxu0 0.0
    %v1221 = vand.u32 %v791, 4294901760
    %1222 = vmatpush1.msra.mxu0 %v1221
    %1223 = vmatprep.subr.mxu0 0.0
    %v1224 = vand.u32 %v790, 4294901760
    %1225 = vmatpush1.msra.mxu0 %v1224
    %1226 = vmatprep.subr.mxu0 0.0
    %v1227 = vand.u32 %v789, 4294901760
    %1228 = vmatpush1.msra.mxu0 %v1227
    %1229 = vmatprep.subr.mxu0 0.0
    %1230 = vmatpush2.msra.mxu0 0.0
    %1231 = vmatprep.subr.mxu0 0.0
    %1232 = vmatpush2.msra.mxu0 0.0
    %1233 = vmatprep.subr.mxu0 0.0
    %1234 = vmatpush2.msra.mxu0 0.0
    %1235 = vmatprep.subr.mxu0 0.0
    %1236 = vmatpush2.msra.mxu0 0.0
    %1237 = vmatprep.subr.mxu0 0.0
    %1238 = vmatpush2.msra.mxu0 0.0
    %1239 = vmatprep.subr.mxu0 0.0
    %1240 = vmatpush2.msra.mxu0 0.0
    %1241 = vmatprep.subr.mxu0 0.0
    %1242 = vmatpush2.msra.mxu0 0.0
    %1243 = vmatprep.subr.mxu0 0.0
    %1244 = vmatpush2.msra.mxu0 0.0
    %1245 = vmatprep.subr.mxu0 0.0
    %1246 = vmatpush2.msra.mxu0 0.0
    %1247 = vmatprep.subr.mxu0 0.0
    %1248 = vmatpush2.msra.mxu0 0.0
    %1249 = vmatprep.subr.mxu0 0.0
    %1250 = vmatpush2.msra.mxu0 0.0
    %1251 = vmatprep.subr.mxu0 0.0
    %1252 = vmatpush2.msra.mxu0 0.0
    %1253 = vmatprep.subr.mxu0 0.0
    %1254 = vmatpush2.msra.mxu0 0.0
    %1255 = vmatprep.subr.mxu0 0.0
    %1256 = vmatpush2.msra.mxu0 0.0
    %1257 = vmatprep.subr.mxu0 0.0
    %1258 = vmatpush2.msra.mxu0 0.0
    %1259 = vmatprep.subr.mxu0 0.0
    %1260 = vmatpush2.msra.mxu0 0.0
    %1261 = vmatprep.mubr.f32.mxu0 0.0
    %v1262 = vand.u32 %v787, 4294901760
    %v1263 = vsub.f32 %v787, %v1262
    %v1264 = vand.u32 %v1263, 4294901760
    %1265 = vmatmul.mubr.f32.gmra.mxu0 %v1264
    %v1266 = vpop.f32.mrf.mxu0
    %v1267 = vadd.f32 %v1171, %v1266
    %v1268 = vpop.f32.mrf.mxu0
    %1269 = vmatprep.mubr.f32.mxu0 0.0
    %v1270 = vand.u32 %v788, 4294901760
    %v1271 = vsub.f32 %v788, %v1270
    %v1272 = vand.u32 %v1271, 4294901760
    %1273 = vmatmul.mubr.f32.gmra.mxu0 %v1272
    %v1274 = vpop.f32.mrf.mxu0
    %v1275 = vadd.f32 %v1178, %v1274
    %v1276 = vpop.f32.mrf.mxu0
    %1277 = vdwg.mxu0
    %1278 = vmatprep.subr.mxu0 0.0
    %v1279 = vand.u32 %v804, 4294901760
    %v1280 = vsub.f32 %v804, %v1279
    %v1281 = vand.u32 %v1280, 4294901760
    %1282 = vmatpush1.msra.mxu0 %v1281
    %1283 = vmatprep.subr.mxu0 0.0
    %v1284 = vand.u32 %v803, 4294901760
    %v1285 = vsub.f32 %v803, %v1284
    %v1286 = vand.u32 %v1285, 4294901760
    %1287 = vmatpush1.msra.mxu0 %v1286
    %1288 = vmatprep.subr.mxu0 0.0
    %v1289 = vand.u32 %v802, 4294901760
    %v1290 = vsub.f32 %v802, %v1289
    %v1291 = vand.u32 %v1290, 4294901760
    %1292 = vmatpush1.msra.mxu0 %v1291
    %1293 = vmatprep.subr.mxu0 0.0
    %v1294 = vand.u32 %v801, 4294901760
    %v1295 = vsub.f32 %v801, %v1294
    %v1296 = vand.u32 %v1295, 4294901760
    %1297 = vmatpush1.msra.mxu0 %v1296
    %1298 = vmatprep.subr.mxu0 0.0
    %v1299 = vand.u32 %v800, 4294901760
    %v1300 = vsub.f32 %v800, %v1299
    %v1301 = vand.u32 %v1300, 4294901760
    %1302 = vmatpush1.msra.mxu0 %v1301
    %1303 = vmatprep.subr.mxu0 0.0
    %v1304 = vand.u32 %v799, 4294901760
    %v1305 = vsub.f32 %v799, %v1304
    %v1306 = vand.u32 %v1305, 4294901760
    %1307 = vmatpush1.msra.mxu0 %v1306
    %1308 = vmatprep.subr.mxu0 0.0
    %v1309 = vand.u32 %v798, 4294901760
    %v1310 = vsub.f32 %v798, %v1309
    %v1311 = vand.u32 %v1310, 4294901760
    %1312 = vmatpush1.msra.mxu0 %v1311
    %1313 = vmatprep.subr.mxu0 0.0
    %v1314 = vand.u32 %v797, 4294901760
    %v1315 = vsub.f32 %v797, %v1314
    %v1316 = vand.u32 %v1315, 4294901760
    %1317 = vmatpush1.msra.mxu0 %v1316
    %1318 = vmatprep.subr.mxu0 0.0
    %v1319 = vand.u32 %v796, 4294901760
    %v1320 = vsub.f32 %v796, %v1319
    %v1321 = vand.u32 %v1320, 4294901760
    %1322 = vmatpush1.msra.mxu0 %v1321
    %1323 = vmatprep.subr.mxu0 0.0
    %v1324 = vand.u32 %v795, 4294901760
    %v1325 = vsub.f32 %v795, %v1324
    %v1326 = vand.u32 %v1325, 4294901760
    %1327 = vmatpush1.msra.mxu0 %v1326
    %1328 = vmatprep.subr.mxu0 0.0
    %v1329 = vand.u32 %v794, 4294901760
    %v1330 = vsub.f32 %v794, %v1329
    %v1331 = vand.u32 %v1330, 4294901760
    %1332 = vmatpush1.msra.mxu0 %v1331
    %1333 = vmatprep.subr.mxu0 0.0
    %v1334 = vand.u32 %v793, 4294901760
    %v1335 = vsub.f32 %v793, %v1334
    %v1336 = vand.u32 %v1335, 4294901760
    %1337 = vmatpush1.msra.mxu0 %v1336
    %1338 = vmatprep.subr.mxu0 0.0
    %v1339 = vand.u32 %v792, 4294901760
    %v1340 = vsub.f32 %v792, %v1339
    %v1341 = vand.u32 %v1340, 4294901760
    %1342 = vmatpush1.msra.mxu0 %v1341
    %1343 = vmatprep.subr.mxu0 0.0
    %v1344 = vand.u32 %v791, 4294901760
    %v1345 = vsub.f32 %v791, %v1344
    %v1346 = vand.u32 %v1345, 4294901760
    %1347 = vmatpush1.msra.mxu0 %v1346
    %1348 = vmatprep.subr.mxu0 0.0
    %v1349 = vand.u32 %v790, 4294901760
    %v1350 = vsub.f32 %v790, %v1349
    %v1351 = vand.u32 %v1350, 4294901760
    %1352 = vmatpush1.msra.mxu0 %v1351
    %1353 = vmatprep.subr.mxu0 0.0
    %v1354 = vand.u32 %v789, 4294901760
    %v1355 = vsub.f32 %v789, %v1354
    %v1356 = vand.u32 %v1355, 4294901760
    %1357 = vmatpush1.msra.mxu0 %v1356
    %1358 = vmatprep.subr.mxu0 0.0
    %1359 = vmatpush2.msra.mxu0 0.0
    %1360 = vmatprep.subr.mxu0 0.0
    %1361 = vmatpush2.msra.mxu0 0.0
    %1362 = vmatprep.subr.mxu0 0.0
    %1363 = vmatpush2.msra.mxu0 0.0
    %1364 = vmatprep.subr.mxu0 0.0
    %1365 = vmatpush2.msra.mxu0 0.0
    %1366 = vmatprep.subr.mxu0 0.0
    %1367 = vmatpush2.msra.mxu0 0.0
    %1368 = vmatprep.subr.mxu0 0.0
    %1369 = vmatpush2.msra.mxu0 0.0
    %1370 = vmatprep.subr.mxu0 0.0
    %1371 = vmatpush2.msra.mxu0 0.0
    %1372 = vmatprep.subr.mxu0 0.0
    %1373 = vmatpush2.msra.mxu0 0.0
    %1374 = vmatprep.subr.mxu0 0.0
    %1375 = vmatpush2.msra.mxu0 0.0
    %1376 = vmatprep.subr.mxu0 0.0
    %1377 = vmatpush2.msra.mxu0 0.0
    %1378 = vmatprep.subr.mxu0 0.0
    %1379 = vmatpush2.msra.mxu0 0.0
    %1380 = vmatprep.subr.mxu0 0.0
    %1381 = vmatpush2.msra.mxu0 0.0
    %1382 = vmatprep.subr.mxu0 0.0
    %1383 = vmatpush2.msra.mxu0 0.0
    %1384 = vmatprep.subr.mxu0 0.0
    %1385 = vmatpush2.msra.mxu0 0.0
    %1386 = vmatprep.subr.mxu0 0.0
    %1387 = vmatpush2.msra.mxu0 0.0
    %1388 = vmatprep.subr.mxu0 0.0
    %1389 = vmatpush2.msra.mxu0 0.0
    %1390 = vmatprep.mubr.f32.mxu0 0.0
    %v1391 = vand.u32 %v787, 4294901760
    %1392 = vmatmul.mubr.f32.gmra.mxu0 %v1391
    %v1393 = vpop.f32.mrf.mxu0
    %v1394 = vadd.f32 %v1267, %v1393
    %v1395 = vpop.f32.mrf.mxu0
    %1396 = vmatprep.mubr.f32.mxu0 0.0
    %v1397 = vand.u32 %v788, 4294901760
    %1398 = vmatmul.mubr.f32.gmra.mxu0 %v1397
    %v1399 = vpop.f32.mrf.mxu0
    %v1400 = vadd.f32 %v1275, %v1399
    %v1401 = vpop.f32.mrf.mxu0
    %1402 = vdwg.mxu0
    %1403 = vmatprep.subr.mxu0 0.0
    %v1404 = vand.u32 %v804, 4294901760
    %1405 = vmatpush1.msra.mxu0 %v1404
    %1406 = vmatprep.subr.mxu0 0.0
    %v1407 = vand.u32 %v803, 4294901760
    %1408 = vmatpush1.msra.mxu0 %v1407
    %1409 = vmatprep.subr.mxu0 0.0
    %v1410 = vand.u32 %v802, 4294901760
    %1411 = vmatpush1.msra.mxu0 %v1410
    %1412 = vmatprep.subr.mxu0 0.0
    %v1413 = vand.u32 %v801, 4294901760
    %1414 = vmatpush1.msra.mxu0 %v1413
    %1415 = vmatprep.subr.mxu0 0.0
    %v1416 = vand.u32 %v800, 4294901760
    %1417 = vmatpush1.msra.mxu0 %v1416
    %1418 = vmatprep.subr.mxu0 0.0
    %v1419 = vand.u32 %v799, 4294901760
    %1420 = vmatpush1.msra.mxu0 %v1419
    %1421 = vmatprep.subr.mxu0 0.0
    %v1422 = vand.u32 %v798, 4294901760
    %1423 = vmatpush1.msra.mxu0 %v1422
    %1424 = vmatprep.subr.mxu0 0.0
    %v1425 = vand.u32 %v797, 4294901760
    %1426 = vmatpush1.msra.mxu0 %v1425
    %1427 = vmatprep.subr.mxu0 0.0
    %v1428 = vand.u32 %v796, 4294901760
    %1429 = vmatpush1.msra.mxu0 %v1428
    %1430 = vmatprep.subr.mxu0 0.0
    %v1431 = vand.u32 %v795, 4294901760
    %1432 = vmatpush1.msra.mxu0 %v1431
    %1433 = vmatprep.subr.mxu0 0.0
    %v1434 = vand.u32 %v794, 4294901760
    %1435 = vmatpush1.msra.mxu0 %v1434
    %1436 = vmatprep.subr.mxu0 0.0
    %v1437 = vand.u32 %v793, 4294901760
    %1438 = vmatpush1.msra.mxu0 %v1437
    %1439 = vmatprep.subr.mxu0 0.0
    %v1440 = vand.u32 %v792, 4294901760
    %1441 = vmatpush1.msra.mxu0 %v1440
    %1442 = vmatprep.subr.mxu0 0.0
    %v1443 = vand.u32 %v791, 4294901760
    %1444 = vmatpush1.msra.mxu0 %v1443
    %1445 = vmatprep.subr.mxu0 0.0
    %v1446 = vand.u32 %v790, 4294901760
    %1447 = vmatpush1.msra.mxu0 %v1446
    %1448 = vmatprep.subr.mxu0 0.0
    %v1449 = vand.u32 %v789, 4294901760
    %1450 = vmatpush1.msra.mxu0 %v1449
    %1451 = vmatprep.subr.mxu0 0.0
    %1452 = vmatpush2.msra.mxu0 0.0
    %1453 = vmatprep.subr.mxu0 0.0
    %1454 = vmatpush2.msra.mxu0 0.0
    %1455 = vmatprep.subr.mxu0 0.0
    %1456 = vmatpush2.msra.mxu0 0.0
    %1457 = vmatprep.subr.mxu0 0.0
    %1458 = vmatpush2.msra.mxu0 0.0
    %1459 = vmatprep.subr.mxu0 0.0
    %1460 = vmatpush2.msra.mxu0 0.0
    %1461 = vmatprep.subr.mxu0 0.0
    %1462 = vmatpush2.msra.mxu0 0.0
    %1463 = vmatprep.subr.mxu0 0.0
    %1464 = vmatpush2.msra.mxu0 0.0
    %1465 = vmatprep.subr.mxu0 0.0
    %1466 = vmatpush2.msra.mxu0 0.0
    %1467 = vmatprep.subr.mxu0 0.0
    %1468 = vmatpush2.msra.mxu0 0.0
    %1469 = vmatprep.subr.mxu0 0.0
    %1470 = vmatpush2.msra.mxu0 0.0
    %1471 = vmatprep.subr.mxu0 0.0
    %1472 = vmatpush2.msra.mxu0 0.0
    %1473 = vmatprep.subr.mxu0 0.0
    %1474 = vmatpush2.msra.mxu0 0.0
    %1475 = vmatprep.subr.mxu0 0.0
    %1476 = vmatpush2.msra.mxu0 0.0
    %1477 = vmatprep.subr.mxu0 0.0
    %1478 = vmatpush2.msra.mxu0 0.0
    %1479 = vmatprep.subr.mxu0 0.0
    %1480 = vmatpush2.msra.mxu0 0.0
    %1481 = vmatprep.subr.mxu0 0.0
    %1482 = vmatpush2.msra.mxu0 0.0
    %1483 = vmatprep.mubr.f32.mxu0 0.0
    %v1484 = vand.u32 %v787, 4294901760
    %1485 = vmatmul.mubr.f32.gmra.mxu0 %v1484
    %v1486 = vpop.f32.mrf.mxu0
    %v1487 = vadd.f32 %v1394, %v1486
    %v1488 = vpop.f32.mrf.mxu0
    %1489 = vmatprep.mubr.f32.mxu0 0.0
    %v1490 = vand.u32 %v788, 4294901760
    %1491 = vmatmul.mubr.f32.gmra.mxu0 %v1490
    %v1492 = vpop.f32.mrf.mxu0
    %v1493 = vadd.f32 %v1400, %v1492
    %v1494 = vpop.f32.mrf.mxu0
    %1495 = vdwg.mxu0
    %1496 = vst [vmem:[#allocation8] sm:$0xff] %v1487
    %1497 = vst [vmem:[#allocation8 + $0x8] sm:$0xff] %v1493
    // Predicated region
    $region34: #{tpu_custom_call.1} parent=1 // pred_check
      _
    $region35: #{tpu_custom_call.1} parent=1 // pred_check_branch
      %1499 = sbr.rel (0) target = $region37
    $region36: #{tpu_custom_call.1} parent=1 // pred_region
      %s1501 = ssub.s32 256, 256
      %1502 = vsyncadd [#allocation4], %s1501
      %s1503 = sshll.u32 [#allocation8], 4
      %s1504 = int_to_ptr.vmem [resolvable:$true] %s1503
      %1509 = dma.vmem_to_hbm [thread:$0]  %s1504, 256, %s5, [#allocation4], 128, 128, 8
    $region37: #{tpu_custom_call.1} parent=1 // pred_fallthru
      _
    // Predicated region
    $region38: #{tpu_custom_call.1} parent=1 // pred_check
      _
    $region39: #{tpu_custom_call.1} parent=1 // pred_check_branch
      %1511 = sbr.rel (0) target = $region41
    $region40: #{tpu_custom_call.1} parent=1 // pred_region
      %1512 = dma.done [#allocation4], 256
    $region41: #{tpu_custom_call.1} parent=1 // pred_fallthru
      _
    %1513 = vsyncpa [#allocation3], 1
    %1514 = vsyncpa [#allocation6], 1
    %1515 = vsyncpa [#allocation4], 1

</llo_original>
